<compile_context>
chip_gen: v5e
topology: v5e:2x2
jax: 0.10.0
libtpu: 0.0.40
codegen_flags: <defaults>
</compile_context>

<pallas_src>
import math

import jax
import jax.numpy as jnp
from jax import lax
from jax.experimental import pallas as pl
from jax.experimental.pallas import tpu as pltpu

# ---------------- config (small, consistent with the module) ----------------
BATCH = 2
SEQ = 8
EMBED = 32
NUM_HEADS = 4
HEAD_DIM = EMBED // NUM_HEADS
HIDDEN = EMBED * 4
LN_EPS = 1e-5
NEG_INF = -1e30                      # finite masked value (avoids inf-inf NaN)
LOG2_SEQ = SEQ.bit_length() - 1      # SEQ is a power of two

# Packed small-parameter array: one row per vector, 128 lanes.
PVEC_LANES = max(HIDDEN, EMBED, 128)
ROW_LN1_G, ROW_LN1_B, ROW_BO, ROW_LN2_G, ROW_LN2_B, ROW_B1, ROW_B2 = range(7)
ROW_BQKV = 7                          # rows 7 .. 7+3H-1: per-(q/k/v, head) bias
PVEC_ROWS = ROW_BQKV + 3 * NUM_HEADS


def _layernorm(h, gamma, beta):
    # gamma/beta are (1, C) row vectors, broadcast against (N, C).
    mu = jnp.mean(h, axis=-1, keepdims=True)
    var = jnp.mean(jnp.square(h - mu), axis=-1, keepdims=True)
    return (h - mu) * lax.rsqrt(var + LN_EPS) * gamma + beta


def _gelu_tanh(x):
    # nn.GELU(approximate='tanh')
    c = math.sqrt(2.0 / math.pi)
    return 0.5 * x * (1.0 + jnp.tanh(c * (x + 0.044715 * x * x * x)))


def transformer_block_kernel(x_ref, pvec_ref, wqkv_ref, wo_ref, w1_ref, w2_ref,
                             o_ref):
    B, T, C, H, D = BATCH, SEQ, EMBED, NUM_HEADS, HEAD_DIM
    N = B * T

    x = x_ref[...]            # (N, C): tokens already flattened in the wrapper
    pv = pvec_ref[...]        # (PVEC_ROWS, 128): all small params in one DMA

    ln1_g = pv[ROW_LN1_G:ROW_LN1_G + 1, :C]
    ln1_b = pv[ROW_LN1_B:ROW_LN1_B + 1, :C]
    bo    = pv[ROW_BO:ROW_BO + 1, :C]
    ln2_g = pv[ROW_LN2_G:ROW_LN2_G + 1, :C]
    ln2_b = pv[ROW_LN2_B:ROW_LN2_B + 1, :C]
    b1    = pv[ROW_B1:ROW_B1 + 1, :HIDDEN]
    b2    = pv[ROW_B2:ROW_B2 + 1, :C]

    # ---- ln1 + causal multi-head self-attention ----
    h1 = _layernorm(x, ln1_g, ln1_b)

    # Additive mask, built once: visible iff same batch element AND causal.
    # Shifts/ands only (no vector int div/mod). The same-batch condition
    # includes the diagonal, so no row is fully masked (no NaN softmax rows).
    ri = lax.broadcasted_iota(jnp.int32, (N, N), 0)
    ci = lax.broadcasted_iota(jnp.int32, (N, N), 1)
    visible = ((ri >> LOG2_SEQ) == (ci >> LOG2_SEQ)) & \
              ((ci & (T - 1)) <= (ri & (T - 1)))
    bias = jnp.where(visible, 0.0, NEG_INF).astype(jnp.float32)

    inv_sqrt_d = jnp.float32(1.0 / math.sqrt(D))
    attn_out = jnp.zeros((N, C), jnp.float32)

    # Static unroll (H=4 is small).  TODO(synk): at GPT-2 H=12 use lax.fori_loop
    # or a grid axis over heads so unrolled live ranges don't spill vregs.
    for h in range(H):
        # Per-head Q/K/V via leading-dim weight indexing (host-side re-layout);
        # no 8-lane slices of a fused qkv activation.
        q = jnp.dot(h1, wqkv_ref[0 * H + h], preferred_element_type=jnp.float32)
        q = q + pv[ROW_BQKV + 0 * H + h:ROW_BQKV + 0 * H + h + 1, :D]
        k = jnp.dot(h1, wqkv_ref[1 * H + h], preferred_element_type=jnp.float32)
        k = k + pv[ROW_BQKV + 1 * H + h:ROW_BQKV + 1 * H + h + 1, :D]
        v = jnp.dot(h1, wqkv_ref[2 * H + h], preferred_element_type=jnp.float32)
        v = v + pv[ROW_BQKV + 2 * H + h:ROW_BQKV + 2 * H + h + 1, :D]

        q = q * inv_sqrt_d                    # scale Q (N,D), not scores (N,N)

        # 2-D MXU matmul contracting last dims (no materialized transpose).
        s = jnp.einsum('nd,md->nm', q, k,
                       preferred_element_type=jnp.float32) + bias      # (N, N)
        m = jnp.max(s, axis=-1, keepdims=True)
        p = jnp.exp(s - m)
        denom = jnp.sum(p, axis=-1, keepdims=True)
        # approx=False keeps the tight correctness tolerance; switch to
        # approx=True (EUP slot) at real dims.
        attn = p * pl.reciprocal(denom, approx=False)

        ctx = jnp.dot(attn, v, preferred_element_type=jnp.float32)     # (N, D)
        # Per-head out-projection accumulation (no lane-dim head concat);
        # wo_ref[h] is the (D, C) row block of the original (C, C) weight.
        attn_out = attn_out + jnp.dot(ctx, wo_ref[h],
                                      preferred_element_type=jnp.float32)

    x2 = x + attn_out + bo                                   # residual 1

    # ---- ln2 + feed-forward (tanh GELU) ----
    h2 = _layernorm(x2, ln2_g, ln2_b)
    f = jnp.dot(h2, w1_ref[...], preferred_element_type=jnp.float32) + b1
    f = _gelu_tanh(f)
    f = jnp.dot(f, w2_ref[...], preferred_element_type=jnp.float32) + b2

    o_ref[...] = x2 + f                                      # residual 2


# ---------------- host-side (free) parameter re-layout ----------------
def prepare_params(params):
    (ln1_g, ln1_b, wqkv, bqkv, wo, bo, ln2_g, ln2_b, w1, b1, w2, b2) = params
    C, H, D = EMBED, NUM_HEADS, HEAD_DIM

    pvec = jnp.zeros((PVEC_ROWS, PVEC_LANES), jnp.float32)
    pvec = pvec.at[ROW_LN1_G, :C].set(ln1_g.reshape(-1))
    pvec = pvec.at[ROW_LN1_B, :C].set(ln1_b.reshape(-1))
    pvec = pvec.at[ROW_BO, :C].set(bo.reshape(-1))
    pvec = pvec.at[ROW_LN2_G, :C].set(ln2_g.reshape(-1))
    pvec = pvec.at[ROW_LN2_B, :C].set(ln2_b.reshape(-1))
    pvec = pvec.at[ROW_B1, :HIDDEN].set(b1.reshape(-1))
    pvec = pvec.at[ROW_B2, :C].set(b2.reshape(-1))
    pvec = pvec.at[ROW_BQKV:ROW_BQKV + 3 * H, :D].set(bqkv.reshape(3 * H, D))

    # (C, 3C) -> (3H, C, D): row j*H + h is head h's q/k/v weight (j in {q,k,v}).
    wqkv_heads = wqkv.reshape(C, 3, H, D).transpose(1, 2, 0, 3).reshape(3 * H, C, D)
    # (C, C) -> (H, D, C): out-projection row block per head.
    wo_heads = wo.reshape(H, D, C)

    return (pvec, wqkv_heads, wo_heads, w1, w2)


def transformer_block(x, prepared):
    pvec, wqkv_heads, wo_heads, w1, w2 = prepared
    B, T, C = x.shape
    x2d = x.reshape(B * T, C)          # contiguous -> free; no in-kernel reshape

    vmem = pl.BlockSpec(memory_space=pltpu.MemorySpace.VMEM)
    out2d = pl.pallas_call(
        transformer_block_kernel,
        out_shape=jax.ShapeDtypeStruct((B * T, C), jnp.float32),
        in_specs=[vmem] * 6,           # whole (tiny) arrays resident in VMEM
        out_specs=vmem,
    )(x2d, pvec, wqkv_heads, wo_heads, w1, w2)
    return out2d.reshape(B, T, C)


# ---------------- pure-JAX reference (for correctness check) ----------------
def reference_block(x, params):
    (ln1_g, ln1_b, wqkv, bqkv, wo, bo, ln2_g, ln2_b, w1, b1, w2, b2) = params
    B, T, C = x.shape
    H, D = NUM_HEADS, C // NUM_HEADS

    h1 = _layernorm(x, ln1_g, ln1_b)
    qkv = h1 @ wqkv + bqkv[0]
    q, k, v = jnp.split(qkv, 3, axis=-1)
    q = q.reshape(B, T, H, D).transpose(0, 2, 1, 3)
    k = k.reshape(B, T, H, D).transpose(0, 2, 1, 3)
    v = v.reshape(B, T, H, D).transpose(0, 2, 1, 3)
    scores = jnp.einsum('bhtd,bhsd->bhts', q, k) / math.sqrt(D)
    causal = jnp.tril(jnp.ones((T, T), bool))[None, None]
    scores = jnp.where(causal, scores, -jnp.inf)
    attn = jax.nn.softmax(scores, axis=-1)
    ctx = jnp.einsum('bhts,bhsd->bhtd', attn, v)
    ctx = ctx.transpose(0, 2, 1, 3).reshape(B, T, C)
    x2 = x + (ctx @ wo + bo[0])

    h2 = _layernorm(x2, ln2_g, ln2_b)
    f = _gelu_tanh(h2 @ w1 + b1[0])
    f = f @ w2 + b2[0]
    return x2 + f


# ---------------- deterministic parameter init ----------------
def init_params(key, C, hidden):
    ks = jax.random.split(key, 8)
    s = 0.02
    ln1_g = jnp.ones((1, C), jnp.float32)
    ln1_b = jnp.zeros((1, C), jnp.float32)
    wqkv = s * jax.random.normal(ks[0], (C, 3 * C), jnp.float32)
    bqkv = s * jax.random.normal(ks[1], (1, 3 * C), jnp.float32)
    wo = s * jax.random.normal(ks[2], (C, C), jnp.float32)
    bo = s * jax.random.normal(ks[3], (1, C), jnp.float32)
    ln2_g = jnp.ones((1, C), jnp.float32)
    ln2_b = jnp.zeros((1, C), jnp.float32)
    w1 = s * jax.random.normal(ks[4], (C, hidden), jnp.float32)
    b1 = s * jax.random.normal(ks[5], (1, hidden), jnp.float32)
    w2 = s * jax.random.normal(ks[6], (hidden, C), jnp.float32)
    b2 = s * jax.random.normal(ks[7], (1, C), jnp.float32)
    return (ln1_g, ln1_b, wqkv, bqkv, wo, bo, ln2_g, ln2_b, w1, b1, w2, b2)


if __name__ == "__main__":
    key = jax.random.PRNGKey(0)
    kx, kp = jax.random.split(key)
    x = jax.random.normal(kx, (BATCH, SEQ, EMBED), jnp.float32)
    params = init_params(kp, EMBED, HIDDEN)

    prepared = prepare_params(params)          # one-time host-side re-layout
    out = jax.block_until_ready(transformer_block(x, prepared))
    ref = reference_block(x, params)

    assert out.shape == (BATCH, SEQ, EMBED)
    max_err = float(jnp.max(jnp.abs(out - ref)))
    assert jnp.allclose(out, ref, atol=5e-4, rtol=5e-4), f"max abs err {max_err}"

    print("KERNEL_OK")
</pallas_src>

<mosaic_0001>
module attributes {stable_mosaic.version = 11 : i64} {
  func.func @transformer_block_kernel(%arg0: memref<16x32xf32, #tpu.memory_space<vmem>>, %arg1: memref<19x128xf32, #tpu.memory_space<vmem>>, %arg2: memref<12x32x8xf32, #tpu.memory_space<vmem>>, %arg3: memref<4x8x32xf32, #tpu.memory_space<vmem>>, %arg4: memref<32x128xf32, #tpu.memory_space<vmem>>, %arg5: memref<128x32xf32, #tpu.memory_space<vmem>>, %arg6: memref<16x32xf32, #tpu.memory_space<vmem>>) attributes {dimension_semantics = [], scalar_prefetch = 0 : i64, scratch_operands = 0 : i64, tpu.core_type = #tpu.core_type<tc>} {
    %c0 = arith.constant 0 : index
    %c0_0 = arith.constant 0 : index
    %0 = vector.load %arg0[%c0, %c0_0] : memref<16x32xf32, #tpu.memory_space<vmem>>, vector<16x32xf32>
    %c0_1 = arith.constant 0 : index
    %c0_2 = arith.constant 0 : index
    %1 = vector.load %arg1[%c0_1, %c0_2] : memref<19x128xf32, #tpu.memory_space<vmem>>, vector<19x128xf32>
    %2 = vector.extract_strided_slice %1 {offsets = [0, 0], sizes = [1, 32], strides = [1, 1]} : vector<19x128xf32> to vector<1x32xf32>
    %3 = vector.extract_strided_slice %1 {offsets = [1, 0], sizes = [1, 32], strides = [1, 1]} : vector<19x128xf32> to vector<1x32xf32>
    %4 = vector.extract_strided_slice %1 {offsets = [2, 0], sizes = [1, 32], strides = [1, 1]} : vector<19x128xf32> to vector<1x32xf32>
    %5 = vector.extract_strided_slice %1 {offsets = [3, 0], sizes = [1, 32], strides = [1, 1]} : vector<19x128xf32> to vector<1x32xf32>
    %6 = vector.extract_strided_slice %1 {offsets = [4, 0], sizes = [1, 32], strides = [1, 1]} : vector<19x128xf32> to vector<1x32xf32>
    %7 = vector.extract_strided_slice %1 {offsets = [5, 0], sizes = [1, 128], strides = [1, 1]} : vector<19x128xf32> to vector<1x128xf32>
    %8 = vector.extract_strided_slice %1 {offsets = [6, 0], sizes = [1, 32], strides = [1, 1]} : vector<19x128xf32> to vector<1x32xf32>
    %cst = arith.constant dense<0.000000e+00> : vector<16xf32>
    %9 = vector.multi_reduction <add>, %0, %cst [1] : vector<16x32xf32> to vector<16xf32>
    %10 = vector.shape_cast %9 : vector<16xf32> to vector<16x1xf32>
    %cst_3 = arith.constant 3.200000e+01 : f32
    %11 = vector.broadcast %cst_3 : f32 to vector<16x1xf32>
    %12 = arith.divf %10, %11 : vector<16x1xf32>
    %13 = vector.broadcast %12 : vector<16x1xf32> to vector<16x32xf32>
    %14 = arith.subf %0, %13 : vector<16x32xf32>
    %15 = arith.mulf %14, %14 : vector<16x32xf32>
    %cst_4 = arith.constant dense<0.000000e+00> : vector<16xf32>
    %16 = vector.multi_reduction <add>, %15, %cst_4 [1] : vector<16x32xf32> to vector<16xf32>
    %17 = vector.shape_cast %16 : vector<16xf32> to vector<16x1xf32>
    %cst_5 = arith.constant 3.200000e+01 : f32
    %18 = vector.broadcast %cst_5 : f32 to vector<16x1xf32>
    %19 = arith.divf %17, %18 : vector<16x1xf32>
    %20 = vector.broadcast %12 : vector<16x1xf32> to vector<16x32xf32>
    %21 = arith.subf %0, %20 : vector<16x32xf32>
    %cst_6 = arith.constant 9.99999974E-6 : f32
    %22 = vector.broadcast %cst_6 : f32 to vector<16x1xf32>
    %23 = arith.addf %19, %22 : vector<16x1xf32>
    %24 = math.rsqrt %23 : vector<16x1xf32>
    %25 = vector.broadcast %24 : vector<16x1xf32> to vector<16x32xf32>
    %26 = arith.mulf %21, %25 : vector<16x32xf32>
    %27 = vector.broadcast %2 : vector<1x32xf32> to vector<16x32xf32>
    %28 = arith.mulf %26, %27 : vector<16x32xf32>
    %29 = vector.broadcast %3 : vector<1x32xf32> to vector<16x32xf32>
    %30 = arith.addf %28, %29 : vector<16x32xf32>
    %31 = tpu.iota {dimensions = array<i32: 0>} : vector<16x16xi32>
    %32 = tpu.iota {dimensions = array<i32: 1>} : vector<16x16xi32>
    %c3_i32 = arith.constant 3 : i32
    %33 = vector.broadcast %c3_i32 : i32 to vector<16x16xi32>
    %34 = arith.shrsi %31, %33 : vector<16x16xi32>
    %c3_i32_7 = arith.constant 3 : i32
    %35 = vector.broadcast %c3_i32_7 : i32 to vector<16x16xi32>
    %36 = arith.shrsi %32, %35 : vector<16x16xi32>
    %37 = arith.cmpi eq, %34, %36 : vector<16x16xi32>
    %c7_i32 = arith.constant 7 : i32
    %38 = vector.broadcast %c7_i32 : i32 to vector<16x16xi32>
    %39 = arith.andi %32, %38 : vector<16x16xi32>
    %c7_i32_8 = arith.constant 7 : i32
    %40 = vector.broadcast %c7_i32_8 : i32 to vector<16x16xi32>
    %41 = arith.andi %31, %40 : vector<16x16xi32>
    %42 = arith.cmpi sle, %39, %41 : vector<16x16xi32>
    %43 = arith.andi %37, %42 : vector<16x16xi1>
    %cst_9 = arith.constant 0.000000e+00 : f32
    %cst_10 = arith.constant -1.000000e+30 : f32
    %44 = vector.broadcast %cst_9 : f32 to vector<16x16xf32>
    %45 = vector.broadcast %cst_10 : f32 to vector<16x16xf32>
    %46 = arith.select %43, %44, %45 : vector<16x16xi1>, vector<16x16xf32>
    %cst_11 = arith.constant 0.000000e+00 : f32
    %47 = vector.broadcast %cst_11 : f32 to vector<16x32xf32>
    %c0_12 = arith.constant 0 : index
    %c0_13 = arith.constant 0 : index
    %c0_14 = arith.constant 0 : index
    %48 = vector.load %arg2[%c0_12, %c0_13, %c0_14] : memref<12x32x8xf32, #tpu.memory_space<vmem>>, vector<1x32x8xf32>
    %49 = vector.shape_cast %48 : vector<1x32x8xf32> to vector<32x8xf32>
    %cst_15 = arith.constant dense<0.000000e+00> : vector<16x8xf32>
    %50 = tpu.matmul %30, %49, %cst_15 {dimension_numbers = #tpu.dot_dimension_numbers<[1], [0], [0], [1], [0, 0, 1, 1], [], []>} : vector<16x32xf32>, vector<32x8xf32>, vector<16x8xf32> -> vector<16x8xf32>
    %51 = vector.extract_strided_slice %1 {offsets = [7, 0], sizes = [1, 8], strides = [1, 1]} : vector<19x128xf32> to vector<1x8xf32>
    %52 = vector.broadcast %51 : vector<1x8xf32> to vector<16x8xf32>
    %53 = arith.addf %50, %52 : vector<16x8xf32>
    %c4 = arith.constant 4 : index
    %c0_16 = arith.constant 0 : index
    %c0_17 = arith.constant 0 : index
    %54 = vector.load %arg2[%c4, %c0_16, %c0_17] : memref<12x32x8xf32, #tpu.memory_space<vmem>>, vector<1x32x8xf32>
    %55 = vector.shape_cast %54 : vector<1x32x8xf32> to vector<32x8xf32>
    %cst_18 = arith.constant dense<0.000000e+00> : vector<16x8xf32>
    %56 = tpu.matmul %30, %55, %cst_18 {dimension_numbers = #tpu.dot_dimension_numbers<[1], [0], [0], [1], [0, 0, 1, 1], [], []>} : vector<16x32xf32>, vector<32x8xf32>, vector<16x8xf32> -> vector<16x8xf32>
    %57 = vector.extract_strided_slice %1 {offsets = [11, 0], sizes = [1, 8], strides = [1, 1]} : vector<19x128xf32> to vector<1x8xf32>
    %58 = vector.broadcast %57 : vector<1x8xf32> to vector<16x8xf32>
    %59 = arith.addf %56, %58 : vector<16x8xf32>
    %c8 = arith.constant 8 : index
    %c0_19 = arith.constant 0 : index
    %c0_20 = arith.constant 0 : index
    %60 = vector.load %arg2[%c8, %c0_19, %c0_20] : memref<12x32x8xf32, #tpu.memory_space<vmem>>, vector<1x32x8xf32>
    %61 = vector.shape_cast %60 : vector<1x32x8xf32> to vector<32x8xf32>
    %cst_21 = arith.constant dense<0.000000e+00> : vector<16x8xf32>
    %62 = tpu.matmul %30, %61, %cst_21 {dimension_numbers = #tpu.dot_dimension_numbers<[1], [0], [0], [1], [0, 0, 1, 1], [], []>} : vector<16x32xf32>, vector<32x8xf32>, vector<16x8xf32> -> vector<16x8xf32>
    %63 = vector.extract_strided_slice %1 {offsets = [15, 0], sizes = [1, 8], strides = [1, 1]} : vector<19x128xf32> to vector<1x8xf32>
    %64 = vector.broadcast %63 : vector<1x8xf32> to vector<16x8xf32>
    %65 = arith.addf %62, %64 : vector<16x8xf32>
    %cst_22 = arith.constant 0.353553385 : f32
    %66 = vector.broadcast %cst_22 : f32 to vector<16x8xf32>
    %67 = arith.mulf %53, %66 : vector<16x8xf32>
    "tpu.trace_start"() <{level = 10 : i32, message = "nd,md->nm"}> : () -> ()
    %cst_23 = arith.constant dense<0.000000e+00> : vector<16x16xf32>
    %68 = tpu.matmul %67, %59, %cst_23 {dimension_numbers = #tpu.dot_dimension_numbers<[1], [1], [0], [0], [0, 0, 1, 0], [], []>} : vector<16x8xf32>, vector<16x8xf32>, vector<16x16xf32> -> vector<16x16xf32>
    "tpu.trace_stop"() : () -> ()
    %69 = arith.addf %68, %46 : vector<16x16xf32>
    %cst_24 = arith.constant dense<0xFF800000> : vector<16xf32>
    %70 = vector.multi_reduction <maximumf>, %69, %cst_24 [1] : vector<16x16xf32> to vector<16xf32>
    %71 = vector.shape_cast %70 : vector<16xf32> to vector<16x1xf32>
    %72 = vector.broadcast %71 : vector<16x1xf32> to vector<16x16xf32>
    %73 = arith.subf %69, %72 : vector<16x16xf32>
    %74 = math.exp %73 : vector<16x16xf32>
    %cst_25 = arith.constant dense<0.000000e+00> : vector<16xf32>
    %75 = vector.multi_reduction <add>, %74, %cst_25 [1] : vector<16x16xf32> to vector<16xf32>
    %76 = vector.shape_cast %75 : vector<16xf32> to vector<16x1xf32>
    %77 = tpu.reciprocal %76 : vector<16x1xf32> -> vector<16x1xf32>
    %78 = vector.broadcast %77 : vector<16x1xf32> to vector<16x16xf32>
    %79 = arith.mulf %74, %78 : vector<16x16xf32>
    %cst_26 = arith.constant dense<0.000000e+00> : vector<16x8xf32>
    %80 = tpu.matmul %79, %65, %cst_26 {dimension_numbers = #tpu.dot_dimension_numbers<[1], [0], [0], [1], [0, 0, 1, 1], [], []>} : vector<16x16xf32>, vector<16x8xf32>, vector<16x8xf32> -> vector<16x8xf32>
    %c0_27 = arith.constant 0 : index
    %c0_28 = arith.constant 0 : index
    %c0_29 = arith.constant 0 : index
    %81 = vector.load %arg3[%c0_27, %c0_28, %c0_29] : memref<4x8x32xf32, #tpu.memory_space<vmem>>, vector<1x8x32xf32>
    %82 = vector.shape_cast %81 : vector<1x8x32xf32> to vector<8x32xf32>
    %cst_30 = arith.constant dense<0.000000e+00> : vector<16x32xf32>
    %83 = tpu.matmul %80, %82, %cst_30 {dimension_numbers = #tpu.dot_dimension_numbers<[1], [0], [0], [1], [0, 0, 1, 1], [], []>} : vector<16x8xf32>, vector<8x32xf32>, vector<16x32xf32> -> vector<16x32xf32>
    %84 = arith.addf %47, %83 : vector<16x32xf32>
    %c1 = arith.constant 1 : index
    %c0_31 = arith.constant 0 : index
    %c0_32 = arith.constant 0 : index
    %85 = vector.load %arg2[%c1, %c0_31, %c0_32] : memref<12x32x8xf32, #tpu.memory_space<vmem>>, vector<1x32x8xf32>
    %86 = vector.shape_cast %85 : vector<1x32x8xf32> to vector<32x8xf32>
    %cst_33 = arith.constant dense<0.000000e+00> : vector<16x8xf32>
    %87 = tpu.matmul %30, %86, %cst_33 {dimension_numbers = #tpu.dot_dimension_numbers<[1], [0], [0], [1], [0, 0, 1, 1], [], []>} : vector<16x32xf32>, vector<32x8xf32>, vector<16x8xf32> -> vector<16x8xf32>
    %88 = vector.extract_strided_slice %1 {offsets = [8, 0], sizes = [1, 8], strides = [1, 1]} : vector<19x128xf32> to vector<1x8xf32>
    %89 = vector.broadcast %88 : vector<1x8xf32> to vector<16x8xf32>
    %90 = arith.addf %87, %89 : vector<16x8xf32>
    %c5 = arith.constant 5 : index
    %c0_34 = arith.constant 0 : index
    %c0_35 = arith.constant 0 : index
    %91 = vector.load %arg2[%c5, %c0_34, %c0_35] : memref<12x32x8xf32, #tpu.memory_space<vmem>>, vector<1x32x8xf32>
    %92 = vector.shape_cast %91 : vector<1x32x8xf32> to vector<32x8xf32>
    %cst_36 = arith.constant dense<0.000000e+00> : vector<16x8xf32>
    %93 = tpu.matmul %30, %92, %cst_36 {dimension_numbers = #tpu.dot_dimension_numbers<[1], [0], [0], [1], [0, 0, 1, 1], [], []>} : vector<16x32xf32>, vector<32x8xf32>, vector<16x8xf32> -> vector<16x8xf32>
    %94 = vector.extract_strided_slice %1 {offsets = [12, 0], sizes = [1, 8], strides = [1, 1]} : vector<19x128xf32> to vector<1x8xf32>
    %95 = vector.broadcast %94 : vector<1x8xf32> to vector<16x8xf32>
    %96 = arith.addf %93, %95 : vector<16x8xf32>
    %c9 = arith.constant 9 : index
    %c0_37 = arith.constant 0 : index
    %c0_38 = arith.constant 0 : index
    %97 = vector.load %arg2[%c9, %c0_37, %c0_38] : memref<12x32x8xf32, #tpu.memory_space<vmem>>, vector<1x32x8xf32>
    %98 = vector.shape_cast %97 : vector<1x32x8xf32> to vector<32x8xf32>
    %cst_39 = arith.constant dense<0.000000e+00> : vector<16x8xf32>
    %99 = tpu.matmul %30, %98, %cst_39 {dimension_numbers = #tpu.dot_dimension_numbers<[1], [0], [0], [1], [0, 0, 1, 1], [], []>} : vector<16x32xf32>, vector<32x8xf32>, vector<16x8xf32> -> vector<16x8xf32>
    %100 = vector.extract_strided_slice %1 {offsets = [16, 0], sizes = [1, 8], strides = [1, 1]} : vector<19x128xf32> to vector<1x8xf32>
    %101 = vector.broadcast %100 : vector<1x8xf32> to vector<16x8xf32>
    %102 = arith.addf %99, %101 : vector<16x8xf32>
    %cst_40 = arith.constant 0.353553385 : f32
    %103 = vector.broadcast %cst_40 : f32 to vector<16x8xf32>
    %104 = arith.mulf %90, %103 : vector<16x8xf32>
    "tpu.trace_start"() <{level = 10 : i32, message = "nd,md->nm"}> : () -> ()
    %cst_41 = arith.constant dense<0.000000e+00> : vector<16x16xf32>
    %105 = tpu.matmul %104, %96, %cst_41 {dimension_numbers = #tpu.dot_dimension_numbers<[1], [1], [0], [0], [0, 0, 1, 0], [], []>} : vector<16x8xf32>, vector<16x8xf32>, vector<16x16xf32> -> vector<16x16xf32>
    "tpu.trace_stop"() : () -> ()
    %106 = arith.addf %105, %46 : vector<16x16xf32>
    %cst_42 = arith.constant dense<0xFF800000> : vector<16xf32>
    %107 = vector.multi_reduction <maximumf>, %106, %cst_42 [1] : vector<16x16xf32> to vector<16xf32>
    %108 = vector.shape_cast %107 : vector<16xf32> to vector<16x1xf32>
    %109 = vector.broadcast %108 : vector<16x1xf32> to vector<16x16xf32>
    %110 = arith.subf %106, %109 : vector<16x16xf32>
    %111 = math.exp %110 : vector<16x16xf32>
    %cst_43 = arith.constant dense<0.000000e+00> : vector<16xf32>
    %112 = vector.multi_reduction <add>, %111, %cst_43 [1] : vector<16x16xf32> to vector<16xf32>
    %113 = vector.shape_cast %112 : vector<16xf32> to vector<16x1xf32>
    %114 = tpu.reciprocal %113 : vector<16x1xf32> -> vector<16x1xf32>
    %115 = vector.broadcast %114 : vector<16x1xf32> to vector<16x16xf32>
    %116 = arith.mulf %111, %115 : vector<16x16xf32>
    %cst_44 = arith.constant dense<0.000000e+00> : vector<16x8xf32>
    %117 = tpu.matmul %116, %102, %cst_44 {dimension_numbers = #tpu.dot_dimension_numbers<[1], [0], [0], [1], [0, 0, 1, 1], [], []>} : vector<16x16xf32>, vector<16x8xf32>, vector<16x8xf32> -> vector<16x8xf32>
    %c1_45 = arith.constant 1 : index
    %c0_46 = arith.constant 0 : index
    %c0_47 = arith.constant 0 : index
    %118 = vector.load %arg3[%c1_45, %c0_46, %c0_47] : memref<4x8x32xf32, #tpu.memory_space<vmem>>, vector<1x8x32xf32>
    %119 = vector.shape_cast %118 : vector<1x8x32xf32> to vector<8x32xf32>
    %cst_48 = arith.constant dense<0.000000e+00> : vector<16x32xf32>
    %120 = tpu.matmul %117, %119, %cst_48 {dimension_numbers = #tpu.dot_dimension_numbers<[1], [0], [0], [1], [0, 0, 1, 1], [], []>} : vector<16x8xf32>, vector<8x32xf32>, vector<16x32xf32> -> vector<16x32xf32>
    %121 = arith.addf %84, %120 : vector<16x32xf32>
    %c2 = arith.constant 2 : index
    %c0_49 = arith.constant 0 : index
    %c0_50 = arith.constant 0 : index
    %122 = vector.load %arg2[%c2, %c0_49, %c0_50] : memref<12x32x8xf32, #tpu.memory_space<vmem>>, vector<1x32x8xf32>
    %123 = vector.shape_cast %122 : vector<1x32x8xf32> to vector<32x8xf32>
    %cst_51 = arith.constant dense<0.000000e+00> : vector<16x8xf32>
    %124 = tpu.matmul %30, %123, %cst_51 {dimension_numbers = #tpu.dot_dimension_numbers<[1], [0], [0], [1], [0, 0, 1, 1], [], []>} : vector<16x32xf32>, vector<32x8xf32>, vector<16x8xf32> -> vector<16x8xf32>
    %125 = vector.extract_strided_slice %1 {offsets = [9, 0], sizes = [1, 8], strides = [1, 1]} : vector<19x128xf32> to vector<1x8xf32>
    %126 = vector.broadcast %125 : vector<1x8xf32> to vector<16x8xf32>
    %127 = arith.addf %124, %126 : vector<16x8xf32>
    %c6 = arith.constant 6 : index
    %c0_52 = arith.constant 0 : index
    %c0_53 = arith.constant 0 : index
    %128 = vector.load %arg2[%c6, %c0_52, %c0_53] : memref<12x32x8xf32, #tpu.memory_space<vmem>>, vector<1x32x8xf32>
    %129 = vector.shape_cast %128 : vector<1x32x8xf32> to vector<32x8xf32>
    %cst_54 = arith.constant dense<0.000000e+00> : vector<16x8xf32>
    %130 = tpu.matmul %30, %129, %cst_54 {dimension_numbers = #tpu.dot_dimension_numbers<[1], [0], [0], [1], [0, 0, 1, 1], [], []>} : vector<16x32xf32>, vector<32x8xf32>, vector<16x8xf32> -> vector<16x8xf32>
    %131 = vector.extract_strided_slice %1 {offsets = [13, 0], sizes = [1, 8], strides = [1, 1]} : vector<19x128xf32> to vector<1x8xf32>
    %132 = vector.broadcast %131 : vector<1x8xf32> to vector<16x8xf32>
    %133 = arith.addf %130, %132 : vector<16x8xf32>
    %c10 = arith.constant 10 : index
    %c0_55 = arith.constant 0 : index
    %c0_56 = arith.constant 0 : index
    %134 = vector.load %arg2[%c10, %c0_55, %c0_56] : memref<12x32x8xf32, #tpu.memory_space<vmem>>, vector<1x32x8xf32>
    %135 = vector.shape_cast %134 : vector<1x32x8xf32> to vector<32x8xf32>
    %cst_57 = arith.constant dense<0.000000e+00> : vector<16x8xf32>
    %136 = tpu.matmul %30, %135, %cst_57 {dimension_numbers = #tpu.dot_dimension_numbers<[1], [0], [0], [1], [0, 0, 1, 1], [], []>} : vector<16x32xf32>, vector<32x8xf32>, vector<16x8xf32> -> vector<16x8xf32>
    %137 = vector.extract_strided_slice %1 {offsets = [17, 0], sizes = [1, 8], strides = [1, 1]} : vector<19x128xf32> to vector<1x8xf32>
    %138 = vector.broadcast %137 : vector<1x8xf32> to vector<16x8xf32>
    %139 = arith.addf %136, %138 : vector<16x8xf32>
    %cst_58 = arith.constant 0.353553385 : f32
    %140 = vector.broadcast %cst_58 : f32 to vector<16x8xf32>
    %141 = arith.mulf %127, %140 : vector<16x8xf32>
    "tpu.trace_start"() <{level = 10 : i32, message = "nd,md->nm"}> : () -> ()
    %cst_59 = arith.constant dense<0.000000e+00> : vector<16x16xf32>
    %142 = tpu.matmul %141, %133, %cst_59 {dimension_numbers = #tpu.dot_dimension_numbers<[1], [1], [0], [0], [0, 0, 1, 0], [], []>} : vector<16x8xf32>, vector<16x8xf32>, vector<16x16xf32> -> vector<16x16xf32>
    "tpu.trace_stop"() : () -> ()
    %143 = arith.addf %142, %46 : vector<16x16xf32>
    %cst_60 = arith.constant dense<0xFF800000> : vector<16xf32>
    %144 = vector.multi_reduction <maximumf>, %143, %cst_60 [1] : vector<16x16xf32> to vector<16xf32>
    %145 = vector.shape_cast %144 : vector<16xf32> to vector<16x1xf32>
    %146 = vector.broadcast %145 : vector<16x1xf32> to vector<16x16xf32>
    %147 = arith.subf %143, %146 : vector<16x16xf32>
    %148 = math.exp %147 : vector<16x16xf32>
    %cst_61 = arith.constant dense<0.000000e+00> : vector<16xf32>
    %149 = vector.multi_reduction <add>, %148, %cst_61 [1] : vector<16x16xf32> to vector<16xf32>
    %150 = vector.shape_cast %149 : vector<16xf32> to vector<16x1xf32>
    %151 = tpu.reciprocal %150 : vector<16x1xf32> -> vector<16x1xf32>
    %152 = vector.broadcast %151 : vector<16x1xf32> to vector<16x16xf32>
    %153 = arith.mulf %148, %152 : vector<16x16xf32>
    %cst_62 = arith.constant dense<0.000000e+00> : vector<16x8xf32>
    %154 = tpu.matmul %153, %139, %cst_62 {dimension_numbers = #tpu.dot_dimension_numbers<[1], [0], [0], [1], [0, 0, 1, 1], [], []>} : vector<16x16xf32>, vector<16x8xf32>, vector<16x8xf32> -> vector<16x8xf32>
    %c2_63 = arith.constant 2 : index
    %c0_64 = arith.constant 0 : index
    %c0_65 = arith.constant 0 : index
    %155 = vector.load %arg3[%c2_63, %c0_64, %c0_65] : memref<4x8x32xf32, #tpu.memory_space<vmem>>, vector<1x8x32xf32>
    %156 = vector.shape_cast %155 : vector<1x8x32xf32> to vector<8x32xf32>
    %cst_66 = arith.constant dense<0.000000e+00> : vector<16x32xf32>
    %157 = tpu.matmul %154, %156, %cst_66 {dimension_numbers = #tpu.dot_dimension_numbers<[1], [0], [0], [1], [0, 0, 1, 1], [], []>} : vector<16x8xf32>, vector<8x32xf32>, vector<16x32xf32> -> vector<16x32xf32>
    %158 = arith.addf %121, %157 : vector<16x32xf32>
    %c3 = arith.constant 3 : index
    %c0_67 = arith.constant 0 : index
    %c0_68 = arith.constant 0 : index
    %159 = vector.load %arg2[%c3, %c0_67, %c0_68] : memref<12x32x8xf32, #tpu.memory_space<vmem>>, vector<1x32x8xf32>
    %160 = vector.shape_cast %159 : vector<1x32x8xf32> to vector<32x8xf32>
    %cst_69 = arith.constant dense<0.000000e+00> : vector<16x8xf32>
    %161 = tpu.matmul %30, %160, %cst_69 {dimension_numbers = #tpu.dot_dimension_numbers<[1], [0], [0], [1], [0, 0, 1, 1], [], []>} : vector<16x32xf32>, vector<32x8xf32>, vector<16x8xf32> -> vector<16x8xf32>
    %162 = vector.extract_strided_slice %1 {offsets = [10, 0], sizes = [1, 8], strides = [1, 1]} : vector<19x128xf32> to vector<1x8xf32>
    %163 = vector.broadcast %162 : vector<1x8xf32> to vector<16x8xf32>
    %164 = arith.addf %161, %163 : vector<16x8xf32>
    %c7 = arith.constant 7 : index
    %c0_70 = arith.constant 0 : index
    %c0_71 = arith.constant 0 : index
    %165 = vector.load %arg2[%c7, %c0_70, %c0_71] : memref<12x32x8xf32, #tpu.memory_space<vmem>>, vector<1x32x8xf32>
    %166 = vector.shape_cast %165 : vector<1x32x8xf32> to vector<32x8xf32>
    %cst_72 = arith.constant dense<0.000000e+00> : vector<16x8xf32>
    %167 = tpu.matmul %30, %166, %cst_72 {dimension_numbers = #tpu.dot_dimension_numbers<[1], [0], [0], [1], [0, 0, 1, 1], [], []>} : vector<16x32xf32>, vector<32x8xf32>, vector<16x8xf32> -> vector<16x8xf32>
    %168 = vector.extract_strided_slice %1 {offsets = [14, 0], sizes = [1, 8], strides = [1, 1]} : vector<19x128xf32> to vector<1x8xf32>
    %169 = vector.broadcast %168 : vector<1x8xf32> to vector<16x8xf32>
    %170 = arith.addf %167, %169 : vector<16x8xf32>
    %c11 = arith.constant 11 : index
    %c0_73 = arith.constant 0 : index
    %c0_74 = arith.constant 0 : index
    %171 = vector.load %arg2[%c11, %c0_73, %c0_74] : memref<12x32x8xf32, #tpu.memory_space<vmem>>, vector<1x32x8xf32>
    %172 = vector.shape_cast %171 : vector<1x32x8xf32> to vector<32x8xf32>
    %cst_75 = arith.constant dense<0.000000e+00> : vector<16x8xf32>
    %173 = tpu.matmul %30, %172, %cst_75 {dimension_numbers = #tpu.dot_dimension_numbers<[1], [0], [0], [1], [0, 0, 1, 1], [], []>} : vector<16x32xf32>, vector<32x8xf32>, vector<16x8xf32> -> vector<16x8xf32>
    %174 = vector.extract_strided_slice %1 {offsets = [18, 0], sizes = [1, 8], strides = [1, 1]} : vector<19x128xf32> to vector<1x8xf32>
    %175 = vector.broadcast %174 : vector<1x8xf32> to vector<16x8xf32>
    %176 = arith.addf %173, %175 : vector<16x8xf32>
    %cst_76 = arith.constant 0.353553385 : f32
    %177 = vector.broadcast %cst_76 : f32 to vector<16x8xf32>
    %178 = arith.mulf %164, %177 : vector<16x8xf32>
    "tpu.trace_start"() <{level = 10 : i32, message = "nd,md->nm"}> : () -> ()
    %cst_77 = arith.constant dense<0.000000e+00> : vector<16x16xf32>
    %179 = tpu.matmul %178, %170, %cst_77 {dimension_numbers = #tpu.dot_dimension_numbers<[1], [1], [0], [0], [0, 0, 1, 0], [], []>} : vector<16x8xf32>, vector<16x8xf32>, vector<16x16xf32> -> vector<16x16xf32>
    "tpu.trace_stop"() : () -> ()
    %180 = arith.addf %179, %46 : vector<16x16xf32>
    %cst_78 = arith.constant dense<0xFF800000> : vector<16xf32>
    %181 = vector.multi_reduction <maximumf>, %180, %cst_78 [1] : vector<16x16xf32> to vector<16xf32>
    %182 = vector.shape_cast %181 : vector<16xf32> to vector<16x1xf32>
    %183 = vector.broadcast %182 : vector<16x1xf32> to vector<16x16xf32>
    %184 = arith.subf %180, %183 : vector<16x16xf32>
    %185 = math.exp %184 : vector<16x16xf32>
    %cst_79 = arith.constant dense<0.000000e+00> : vector<16xf32>
    %186 = vector.multi_reduction <add>, %185, %cst_79 [1] : vector<16x16xf32> to vector<16xf32>
    %187 = vector.shape_cast %186 : vector<16xf32> to vector<16x1xf32>
    %188 = tpu.reciprocal %187 : vector<16x1xf32> -> vector<16x1xf32>
    %189 = vector.broadcast %188 : vector<16x1xf32> to vector<16x16xf32>
    %190 = arith.mulf %185, %189 : vector<16x16xf32>
    %cst_80 = arith.constant dense<0.000000e+00> : vector<16x8xf32>
    %191 = tpu.matmul %190, %176, %cst_80 {dimension_numbers = #tpu.dot_dimension_numbers<[1], [0], [0], [1], [0, 0, 1, 1], [], []>} : vector<16x16xf32>, vector<16x8xf32>, vector<16x8xf32> -> vector<16x8xf32>
    %c3_81 = arith.constant 3 : index
    %c0_82 = arith.constant 0 : index
    %c0_83 = arith.constant 0 : index
    %192 = vector.load %arg3[%c3_81, %c0_82, %c0_83] : memref<4x8x32xf32, #tpu.memory_space<vmem>>, vector<1x8x32xf32>
    %193 = vector.shape_cast %192 : vector<1x8x32xf32> to vector<8x32xf32>
    %cst_84 = arith.constant dense<0.000000e+00> : vector<16x32xf32>
    %194 = tpu.matmul %191, %193, %cst_84 {dimension_numbers = #tpu.dot_dimension_numbers<[1], [0], [0], [1], [0, 0, 1, 1], [], []>} : vector<16x8xf32>, vector<8x32xf32>, vector<16x32xf32> -> vector<16x32xf32>
    %195 = arith.addf %158, %194 : vector<16x32xf32>
    %196 = arith.addf %0, %195 : vector<16x32xf32>
    %197 = vector.broadcast %4 : vector<1x32xf32> to vector<16x32xf32>
    %198 = arith.addf %196, %197 : vector<16x32xf32>
    %cst_85 = arith.constant dense<0.000000e+00> : vector<16xf32>
    %199 = vector.multi_reduction <add>, %198, %cst_85 [1] : vector<16x32xf32> to vector<16xf32>
    %200 = vector.shape_cast %199 : vector<16xf32> to vector<16x1xf32>
    %cst_86 = arith.constant 3.200000e+01 : f32
    %201 = vector.broadcast %cst_86 : f32 to vector<16x1xf32>
    %202 = arith.divf %200, %201 : vector<16x1xf32>
    %203 = vector.broadcast %202 : vector<16x1xf32> to vector<16x32xf32>
    %204 = arith.subf %198, %203 : vector<16x32xf32>
    %205 = arith.mulf %204, %204 : vector<16x32xf32>
    %cst_87 = arith.constant dense<0.000000e+00> : vector<16xf32>
    %206 = vector.multi_reduction <add>, %205, %cst_87 [1] : vector<16x32xf32> to vector<16xf32>
    %207 = vector.shape_cast %206 : vector<16xf32> to vector<16x1xf32>
    %cst_88 = arith.constant 3.200000e+01 : f32
    %208 = vector.broadcast %cst_88 : f32 to vector<16x1xf32>
    %209 = arith.divf %207, %208 : vector<16x1xf32>
    %210 = vector.broadcast %202 : vector<16x1xf32> to vector<16x32xf32>
    %211 = arith.subf %198, %210 : vector<16x32xf32>
    %cst_89 = arith.constant 9.99999974E-6 : f32
    %212 = vector.broadcast %cst_89 : f32 to vector<16x1xf32>
    %213 = arith.addf %209, %212 : vector<16x1xf32>
    %214 = math.rsqrt %213 : vector<16x1xf32>
    %215 = vector.broadcast %214 : vector<16x1xf32> to vector<16x32xf32>
    %216 = arith.mulf %211, %215 : vector<16x32xf32>
    %217 = vector.broadcast %5 : vector<1x32xf32> to vector<16x32xf32>
    %218 = arith.mulf %216, %217 : vector<16x32xf32>
    %219 = vector.broadcast %6 : vector<1x32xf32> to vector<16x32xf32>
    %220 = arith.addf %218, %219 : vector<16x32xf32>
    %c0_90 = arith.constant 0 : index
    %c0_91 = arith.constant 0 : index
    %221 = vector.load %arg4[%c0_90, %c0_91] : memref<32x128xf32, #tpu.memory_space<vmem>>, vector<32x128xf32>
    %cst_92 = arith.constant dense<0.000000e+00> : vector<16x128xf32>
    %222 = tpu.matmul %220, %221, %cst_92 {dimension_numbers = #tpu.dot_dimension_numbers<[1], [0], [0], [1], [0, 0, 1, 1], [], []>} : vector<16x32xf32>, vector<32x128xf32>, vector<16x128xf32> -> vector<16x128xf32>
    %223 = vector.broadcast %7 : vector<1x128xf32> to vector<16x128xf32>
    %224 = arith.addf %222, %223 : vector<16x128xf32>
    %cst_93 = arith.constant 5.000000e-01 : f32
    %225 = vector.broadcast %cst_93 : f32 to vector<16x128xf32>
    %226 = arith.mulf %225, %224 : vector<16x128xf32>
    %cst_94 = arith.constant 4.471500e-02 : f32
    %227 = vector.broadcast %cst_94 : f32 to vector<16x128xf32>
    %228 = arith.mulf %227, %224 : vector<16x128xf32>
    %229 = arith.mulf %228, %224 : vector<16x128xf32>
    %230 = arith.mulf %229, %224 : vector<16x128xf32>
    %231 = arith.addf %224, %230 : vector<16x128xf32>
    %cst_95 = arith.constant 0.797884583 : f32
    %232 = vector.broadcast %cst_95 : f32 to vector<16x128xf32>
    %233 = arith.mulf %232, %231 : vector<16x128xf32>
    %234 = math.tanh %233 : vector<16x128xf32>
    %cst_96 = arith.constant 1.000000e+00 : f32
    %235 = vector.broadcast %cst_96 : f32 to vector<16x128xf32>
    %236 = arith.addf %235, %234 : vector<16x128xf32>
    %237 = arith.mulf %226, %236 : vector<16x128xf32>
    %c0_97 = arith.constant 0 : index
    %c0_98 = arith.constant 0 : index
    %238 = vector.load %arg5[%c0_97, %c0_98] : memref<128x32xf32, #tpu.memory_space<vmem>>, vector<128x32xf32>
    %cst_99 = arith.constant dense<0.000000e+00> : vector<16x32xf32>
    %239 = tpu.matmul %237, %238, %cst_99 {dimension_numbers = #tpu.dot_dimension_numbers<[1], [0], [0], [1], [0, 0, 1, 1], [], []>} : vector<16x128xf32>, vector<128x32xf32>, vector<16x32xf32> -> vector<16x32xf32>
    %240 = vector.broadcast %8 : vector<1x32xf32> to vector<16x32xf32>
    %241 = arith.addf %239, %240 : vector<16x32xf32>
    %242 = arith.addf %198, %241 : vector<16x32xf32>
    %c0_100 = arith.constant 0 : index
    %c0_101 = arith.constant 0 : index
    %243 = vector.load %arg6[%c0_100, %c0_101] : memref<16x32xf32, #tpu.memory_space<vmem>>, vector<16x32xf32>
    tpu.vector_store %arg6[%c0_100, %c0_101], %242 {strides = array<i32>} : memref<16x32xf32, #tpu.memory_space<vmem>>, vector<16x32xf32>,
    return
  }
}

</mosaic_0001>

<llo_original>
// kernel: tpu_custom_call.1
$region0: #{tpu_custom_call.1}
  #allocation0 [shape = 'u32[]', space=smem, size = 0x4, offset = 0x4, fixed_abs, tag = 'smem constant byte address 0x4 - core index']
  #allocation1 [shape = 'u32[72,128]{1,0:T(1,128)}', space=vmem, size = 0x9000, scoped, tag = 'internal scratch']
  %s0 = inlined_call_operand.vmem [shape: f32[16,32], index: 0, kind: input, shape index: {}]
  %s1 = inlined_call_operand.vmem [shape: f32[19,128], index: 1, kind: input, shape index: {}]
  %s2 = inlined_call_operand.vmem [shape: f32[12,32,8], index: 2, kind: input, shape index: {}]
  %s3 = inlined_call_operand.vmem [shape: f32[4,8,32], index: 3, kind: input, shape index: {}]
  %s4 = inlined_call_operand.vmem [shape: f32[32,128], index: 4, kind: input, shape index: {}]
  %s5 = inlined_call_operand.vmem [shape: f32[128,32], index: 5, kind: input, shape index: {}]
  %s6 = inlined_call_operand.hbm [shape: f32[16,32], index: 6, kind: output, shape index: {}]
  %s7 = sld [smem:[#allocation0]]
  $region34: #{tpu_custom_call.1} parent=0
    _
  %s9 = ssub.s32 1, %s7
  %s10 = scalar_select 0, %s9, %s7
  $region1: #{tpu_custom_call.1} parent=0
    #allocation2 [shape = 'u8[8192]{0}', space=vmem, size = 0x2000, scoped, tag = 'output window, operand 0, single buffered']
    #allocation3 [shape = 's32[1]{0}', space=sflag, size = 0x4, scoped, tag = 'scoped memory for tpu_custom_call.1']
    %11 = vsyncpa [#allocation3], 0
    // Predicated region
    $region2: #{tpu_custom_call.1} parent=1 // pred_check
      _
    $region3: #{tpu_custom_call.1} parent=1 // pred_check_branch
      %13 = sbr.rel (0) target = $region5
    $region4: #{tpu_custom_call.1} parent=1 // pred_region
      _
    $region5: #{tpu_custom_call.1} parent=1 // pred_fallthru
      _
    // Predicated region
    $region6: #{tpu_custom_call.1} parent=1 // pred_check
      _
    $region7: #{tpu_custom_call.1} parent=1 // pred_check_branch
      %15 = sbr.rel (0) target = $region9
    $region8: #{tpu_custom_call.1} parent=1 // pred_region
      _
    $region9: #{tpu_custom_call.1} parent=1 // pred_fallthru
      _
    // Predicated region
    $region10: #{tpu_custom_call.1} parent=1 // pred_check
      _
    $region11: #{tpu_custom_call.1} parent=1 // pred_check_branch
      %17 = sbr.rel (0) target = $region13
    $region12: #{tpu_custom_call.1} parent=1 // pred_region
      _
    $region13: #{tpu_custom_call.1} parent=1 // pred_fallthru
      _
    // Predicated region
    $region14: #{tpu_custom_call.1} parent=1 // pred_check
      _
    $region15: #{tpu_custom_call.1} parent=1 // pred_check_branch
      %19 = sbr.rel (0) target = $region17
    $region16: #{tpu_custom_call.1} parent=1 // pred_region
      _
    $region17: #{tpu_custom_call.1} parent=1 // pred_fallthru
      _
    // Predicated region
    $region18: #{tpu_custom_call.1} parent=1 // pred_check
      _
    $region19: #{tpu_custom_call.1} parent=1 // pred_check_branch
      %21 = sbr.rel (0) target = $region21
    $region20: #{tpu_custom_call.1} parent=1 // pred_region
      _
    $region21: #{tpu_custom_call.1} parent=1 // pred_fallthru
      _
    // Predicated region
    $region22: #{tpu_custom_call.1} parent=1 // pred_check
      _
    $region23: #{tpu_custom_call.1} parent=1 // pred_check_branch
      %23 = sbr.rel (0) target = $region25
    $region24: #{tpu_custom_call.1} parent=1 // pred_region
      _
    $region25: #{tpu_custom_call.1} parent=1 // pred_fallthru
      _
    %v24 = vld [vmem:[%s0] sm:$0xff]
    %v25 = vld [vmem:[%s0 + $0x8] sm:$0xff]
    %v26 = vld [vmem:[%s1] sm:$0xff]
    %v27 = vld [vmem:[%s1 + $0x8] sm:$0xff]
    %v28 = vld [vmem:[%s1 + $0x10] sm:$0x7]
    %vm29 = vcmask 261120
    %v30 = vsel %vm29, %v24, 0.0
    %31 = vadd.xlane.f32.xlu0 %v30
    %v32 = vpop.xlane.xlu0 %31
    %v33 = vsel %vm29, %v25, 0.0
    %34 = vadd.xlane.f32.xlu0 %v33
    %v35 = vpop.xlane.xlu0 %34
    %v36 = vrcp.pop 32.0
    %v37 = vmul.f32 32.0, %v36
    %v38 = vsub.f32 1.0, %v37
    %v39 = vmul.f32 %v36, %v38
    %v40 = vadd.f32 %v36, %v39
    %vm41 = vweird.f32 %v36
    %v42 = vsel %vm41, %v36, %v40
    %v43 = vmul.f32 %v32, %v42
    %v44 = vmul.f32 %v35, %v42
    %v45 = vsub.f32 %v24, %v43
    %v46 = vsub.f32 %v25, %v44
    %v47 = vmul.f32 %v45, %v45
    %v48 = vmul.f32 %v46, %v46
    %v49 = vsel %vm29, %v47, 0.0
    %50 = vadd.xlane.f32.xlu0 %v49
    %v51 = vpop.xlane.xlu0 %50
    %v52 = vsel %vm29, %v48, 0.0
    %53 = vadd.xlane.f32.xlu0 %v52
    %v54 = vpop.xlane.xlu0 %53
    %v55 = vmul.f32 %v51, %v42
    %v56 = vmul.f32 %v54, %v42
    %v57 = vadd.f32 %v55, 1e-05
    %v58 = vadd.f32 %v56, 1e-05
    %v59 = vrsqrt.pop %v57
    %v60 = vmul.f32 %v59, %v57
    %v61 = vmul.f32 %v60, %v59
    %v62 = vmul.f32 0.5, %v61
    %v63 = vsub.f32 1.5, %v62
    %v64 = vmul.f32 %v59, %v63
    %vm65 = vweird.f32 %v57
    %vm66 = vweird.f32 %v59
    %vm67 = vmor %vm65, %vm66
    %v68 = vsel %vm67, %v59, %v64
    %v69 = vrsqrt.pop %v58
    %v70 = vmul.f32 %v69, %v58
    %v71 = vmul.f32 %v70, %v69
    %v72 = vmul.f32 0.5, %v71
    %v73 = vsub.f32 1.5, %v72
    %v74 = vmul.f32 %v69, %v73
    %vm75 = vweird.f32 %v58
    %vm76 = vweird.f32 %v69
    %vm77 = vmor %vm75, %vm76
    %v78 = vsel %vm77, %v69, %v74
    %v79 = vmul.f32 %v45, %v68
    %v80 = vmul.f32 %v46, %v78
    %v81 = vperm.slane %v26, 0
    %v82 = vmul.f32 %v79, %v81
    %v83 = vmul.f32 %v80, %v81
    %v84 = vperm.slane %v26, 1
    %v85 = vadd.f32 %v82, %v84
    %v86 = vadd.f32 %v83, %v84
    %v87 = vlaneseq
    %v88 = vshrl.u32 %v87, 7
    %v89 = vadd.s32 %v88, 8
    %v90 = vlaneseq
    %v91 = vand.u32 %v90, 127
    %v92 = vshra.s32 %v88, 3
    %v93 = vshra.s32 %v89, 3
    %v94 = vshra.s32 %v91, 3
    %vm95 = vcmp.eq.s32.totalorder %v92, %v94
    %vm96 = vcmp.eq.s32.totalorder %v93, %v94
    %v97 = vand.u32 %v91, 7
    %v98 = vand.u32 %v88, 7
    %v99 = vand.u32 %v89, 7
    %vm100 = vcmp.le.s32.totalorder %v97, %v98
    %vm101 = vcmp.le.s32.totalorder %v97, %v99
    %vm102 = vmand %vm95, %vm100
    %vm103 = vmand %vm96, %vm101
    %v104 = vsel %vm102, 0.0, -1e+30
    %v105 = vsel %vm103, 0.0, -1e+30
    %v106 = vld [vmem:[%s2] sm:$0xff]
    %v107 = vld [vmem:[%s2 + $0x8] sm:$0xff]
    %v108 = vld [vmem:[%s2 + $0x10] sm:$0xff]
    %v109 = vld [vmem:[%s2 + $0x18] sm:$0xff]
    %v110 = vperm.slane %v26, 7
    %v112 = vsel %vm29, %v85, 0
    %v115 = vsel %vm29, %v86, 0
    %117 = vmatpush.msra.mxu0 0.0
    %118 = vmatpush.msra.mxu0 0.0
    %119 = vmatpush.msra.mxu0 0.0
    %120 = vmatpush.msra.mxu0 0.0
    %121 = vmatpush.msra.mxu0 0.0
    %122 = vmatpush.msra.mxu0 0.0
    %123 = vmatpush.msra.mxu0 0.0
    %124 = vmatpush.msra.mxu0 0.0
    %125 = vmatpush.msra.mxu0 0.0
    %126 = vmatpush.msra.mxu0 0.0
    %127 = vmatpush.msra.mxu0 0.0
    %128 = vmatpush.msra.mxu0 0.0
    %129 = vmatpush.msra.mxu0 %v109
    %130 = vmatpush.msra.mxu0 %v108
    %131 = vmatpush.msra.mxu0 %v107
    %132 = vmatpush.msra.mxu0 %v106
    %133 = vmatmul.f32.gmra.mxu0 %v112
    %v134 = vpop.f32.mrf.mxu0
    %v135 = vadd.f32 %v110, %v134
    %136 = vmatmul.f32.gmra.mxu0 %v115
    %v137 = vpop.f32.mrf.mxu0
    %v138 = vadd.f32 %v110, %v137
    %139 = vdwg.mxu0
    %s140 = scalar_lea.vmem %s2, 128
    %v141 = vld [vmem:[%s140] sm:$0xff]
    %v142 = vld [vmem:[%s140 + $0x8] sm:$0xff]
    %v143 = vld [vmem:[%s140 + $0x10] sm:$0xff]
    %v144 = vld [vmem:[%s140 + $0x18] sm:$0xff]
    %v145 = vperm.slane %v27, 3
    %146 = vmatpush.msra.mxu0 0.0
    %147 = vmatpush.msra.mxu0 0.0
    %148 = vmatpush.msra.mxu0 0.0
    %149 = vmatpush.msra.mxu0 0.0
    %150 = vmatpush.msra.mxu0 0.0
    %151 = vmatpush.msra.mxu0 0.0
    %152 = vmatpush.msra.mxu0 0.0
    %153 = vmatpush.msra.mxu0 0.0
    %154 = vmatpush.msra.mxu0 0.0
    %155 = vmatpush.msra.mxu0 0.0
    %156 = vmatpush.msra.mxu0 0.0
    %157 = vmatpush.msra.mxu0 0.0
    %158 = vmatpush.msra.mxu0 %v144
    %159 = vmatpush.msra.mxu0 %v143
    %160 = vmatpush.msra.mxu0 %v142
    %161 = vmatpush.msra.mxu0 %v141
    %162 = vmatmul.f32.gmra.mxu0 %v112
    %v163 = vpop.f32.mrf.mxu0
    %v164 = vadd.f32 %v145, %v163
    %165 = vmatmul.f32.gmra.mxu0 %v115
    %v166 = vpop.f32.mrf.mxu0
    %v167 = vadd.f32 %v145, %v166
    %168 = vdwg.mxu0
    %s169 = scalar_lea.vmem %s2, 256
    %v170 = vld [vmem:[%s169] sm:$0xff]
    %v171 = vld [vmem:[%s169 + $0x8] sm:$0xff]
    %v172 = vld [vmem:[%s169 + $0x10] sm:$0xff]
    %v173 = vld [vmem:[%s169 + $0x18] sm:$0xff]
    %v174 = vperm.slane %v27, 7
    %175 = vmatpush.msra.mxu0 0.0
    %176 = vmatpush.msra.mxu0 0.0
    %177 = vmatpush.msra.mxu0 0.0
    %178 = vmatpush.msra.mxu0 0.0
    %179 = vmatpush.msra.mxu0 0.0
    %180 = vmatpush.msra.mxu0 0.0
    %181 = vmatpush.msra.mxu0 0.0
    %182 = vmatpush.msra.mxu0 0.0
    %183 = vmatpush.msra.mxu0 0.0
    %184 = vmatpush.msra.mxu0 0.0
    %185 = vmatpush.msra.mxu0 0.0
    %186 = vmatpush.msra.mxu0 0.0
    %187 = vmatpush.msra.mxu0 %v173
    %188 = vmatpush.msra.mxu0 %v172
    %189 = vmatpush.msra.mxu0 %v171
    %190 = vmatpush.msra.mxu0 %v170
    %191 = vmatmul.f32.gmra.mxu0 %v112
    %v192 = vpop.f32.mrf.mxu0
    %v193 = vadd.f32 %v174, %v192
    %194 = vmatmul.f32.gmra.mxu0 %v115
    %v195 = vpop.f32.mrf.mxu0
    %v196 = vadd.f32 %v174, %v195
    %197 = vdwg.mxu0
    %v198 = vmul.f32 %v135, 0.35355338
    %v199 = vmul.f32 %v138, 0.35355338
    %vm200 = vcmask 64512
    %v202 = vsel %vm200, %v198, 0
    %v205 = vsel %vm200, %v199, 0
    %v208 = vsel %vm200, %v164, 0
    %v211 = vsel %vm200, %v167, 0
    %213 = vmatpush.xpose.msra.mxu0 0.0
    %214 = vmatpush.xpose.msra.mxu0 0.0
    %215 = vmatpush.xpose.msra.mxu0 0.0
    %216 = vmatpush.xpose.msra.mxu0 0.0
    %217 = vmatpush.xpose.msra.mxu0 0.0
    %218 = vmatpush.xpose.msra.mxu0 0.0
    %219 = vmatpush.xpose.msra.mxu0 0.0
    %220 = vmatpush.xpose.msra.mxu0 0.0
    %221 = vmatpush.xpose.msra.mxu0 0.0
    %222 = vmatpush.xpose.msra.mxu0 0.0
    %223 = vmatpush.xpose.msra.mxu0 0.0
    %224 = vmatpush.xpose.msra.mxu0 0.0
    %225 = vmatpush.xpose.msra.mxu0 0.0
    %226 = vmatpush.xpose.msra.mxu0 0.0
    %227 = vmatpush.xpose.msra.mxu0 %v211
    %228 = vmatpush.xpose.msra.mxu0 %v208
    %229 = vmatmul.f32.gmra.mxu0 %v202
    %v230 = vpop.f32.mrf.mxu0
    %v231 = vadd.f32 %v104, %v230
    %232 = vmatmul.f32.gmra.mxu0 %v205
    %v233 = vpop.f32.mrf.mxu0
    %v234 = vadd.f32 %v105, %v233
    %235 = vdwg.mxu0
    %vm236 = vcmask 130048
    %v237 = vsel %vm236, %v231, -inf
    %238 = vmax.xlane.f32.xlu0 %v237
    %v239 = vpop.xlane.xlu0 %238
    %v240 = vsel %vm236, %v234, -inf
    %241 = vmax.xlane.f32.xlu0 %v240
    %v242 = vpop.xlane.xlu0 %241
    %v243 = vsub.f32 %v231, %v239
    %v244 = vsub.f32 %v234, %v242
    %v245 = vmul.f32 %v243, 1.442695
    %v246 = vpow.pop %v245
    %v247 = vmul.f32 %v244, 1.442695
    %v248 = vpow.pop %v247
    %v249 = vsel %vm236, %v246, 0.0
    %250 = vadd.xlane.f32.xlu0 %v249
    %v251 = vpop.xlane.xlu0 %250
    %v252 = vsel %vm236, %v248, 0.0
    %253 = vadd.xlane.f32.xlu0 %v252
    %v254 = vpop.xlane.xlu0 %253
    %v255 = vrcp.pop %v251
    %v256 = vmul.f32 %v251, %v255
    %v257 = vsub.f32 1.0, %v256
    %v258 = vmul.f32 %v255, %v257
    %v259 = vadd.f32 %v255, %v258
    %vm260 = vweird.f32 %v251
    %vm261 = vweird.f32 %v255
    %vm262 = vmor %vm260, %vm261
    %v263 = vsel %vm262, %v255, %v259
    %v264 = vand.u32 2147483647, %v251
    %vm265 = vcmp.eq.f32.partialorder %v264, 8.507059e+37
    %v266 = vand.u32 %v251, 2147483648
    %v267 = vor.u32 1.1754944e-38, %v266
    %v268 = vsel %vm265, %v267, %v263
    %v269 = vrcp.pop %v254
    %v270 = vmul.f32 %v254, %v269
    %v271 = vsub.f32 1.0, %v270
    %v272 = vmul.f32 %v269, %v271
    %v273 = vadd.f32 %v269, %v272
    %vm274 = vweird.f32 %v254
    %vm275 = vweird.f32 %v269
    %vm276 = vmor %vm274, %vm275
    %v277 = vsel %vm276, %v269, %v273
    %v278 = vand.u32 2147483647, %v254
    %vm279 = vcmp.eq.f32.partialorder %v278, 8.507059e+37
    %v280 = vand.u32 %v254, 2147483648
    %v281 = vor.u32 1.1754944e-38, %v280
    %v282 = vsel %vm279, %v281, %v277
    %v283 = vmul.f32 %v246, %v268
    %v284 = vmul.f32 %v248, %v282
    %v286 = vsel %vm236, %v283, 0
    %v289 = vsel %vm236, %v284, 0
    %291 = vmatpush.msra.mxu0 0.0
    %292 = vmatpush.msra.mxu0 0.0
    %293 = vmatpush.msra.mxu0 0.0
    %294 = vmatpush.msra.mxu0 0.0
    %295 = vmatpush.msra.mxu0 0.0
    %296 = vmatpush.msra.mxu0 0.0
    %297 = vmatpush.msra.mxu0 0.0
    %298 = vmatpush.msra.mxu0 0.0
    %299 = vmatpush.msra.mxu0 0.0
    %300 = vmatpush.msra.mxu0 0.0
    %301 = vmatpush.msra.mxu0 0.0
    %302 = vmatpush.msra.mxu0 0.0
    %303 = vmatpush.msra.mxu0 0.0
    %304 = vmatpush.msra.mxu0 0.0
    %305 = vmatpush.msra.mxu0 %v196
    %306 = vmatpush.msra.mxu0 %v193
    %307 = vmatmul.f32.gmra.mxu0 %v286
    %v308 = vpop.f32.mrf.mxu0
    %v309 = vadd.f32 0.0, %v308
    %310 = vmatmul.f32.gmra.mxu0 %v289
    %v311 = vpop.f32.mrf.mxu0
    %v312 = vadd.f32 0.0, %v311
    %313 = vdwg.mxu0
    %v314 = vld [vmem:[%s3] sm:$0xff]
    %s315 = scalar_lea.vmem %s2, 32
    %v316 = vld [vmem:[%s315] sm:$0xff]
    %v317 = vld [vmem:[%s315 + $0x8] sm:$0xff]
    %v318 = vld [vmem:[%s315 + $0x10] sm:$0xff]
    %v319 = vld [vmem:[%s315 + $0x18] sm:$0xff]
    %v320 = vperm.slane %v27, 0
    %321 = vmatpush.msra.mxu0 0.0
    %322 = vmatpush.msra.mxu0 0.0
    %323 = vmatpush.msra.mxu0 0.0
    %324 = vmatpush.msra.mxu0 0.0
    %325 = vmatpush.msra.mxu0 0.0
    %326 = vmatpush.msra.mxu0 0.0
    %327 = vmatpush.msra.mxu0 0.0
    %328 = vmatpush.msra.mxu0 0.0
    %329 = vmatpush.msra.mxu0 0.0
    %330 = vmatpush.msra.mxu0 0.0
    %331 = vmatpush.msra.mxu0 0.0
    %332 = vmatpush.msra.mxu0 0.0
    %333 = vmatpush.msra.mxu0 %v319
    %334 = vmatpush.msra.mxu0 %v318
    %335 = vmatpush.msra.mxu0 %v317
    %336 = vmatpush.msra.mxu0 %v316
    %337 = vmatmul.f32.gmra.mxu0 %v112
    %v338 = vpop.f32.mrf.mxu0
    %v339 = vadd.f32 %v320, %v338
    %340 = vmatmul.f32.gmra.mxu0 %v115
    %v341 = vpop.f32.mrf.mxu0
    %v342 = vadd.f32 %v320, %v341
    %343 = vdwg.mxu0
    %s344 = scalar_lea.vmem %s2, 160
    %v345 = vld [vmem:[%s344] sm:$0xff]
    %v346 = vld [vmem:[%s344 + $0x8] sm:$0xff]
    %v347 = vld [vmem:[%s344 + $0x10] sm:$0xff]
    %v348 = vld [vmem:[%s344 + $0x18] sm:$0xff]
    %v349 = vperm.slane %v27, 4
    %350 = vmatpush.msra.mxu0 0.0
    %351 = vmatpush.msra.mxu0 0.0
    %352 = vmatpush.msra.mxu0 0.0
    %353 = vmatpush.msra.mxu0 0.0
    %354 = vmatpush.msra.mxu0 0.0
    %355 = vmatpush.msra.mxu0 0.0
    %356 = vmatpush.msra.mxu0 0.0
    %357 = vmatpush.msra.mxu0 0.0
    %358 = vmatpush.msra.mxu0 0.0
    %359 = vmatpush.msra.mxu0 0.0
    %360 = vmatpush.msra.mxu0 0.0
    %361 = vmatpush.msra.mxu0 0.0
    %362 = vmatpush.msra.mxu0 %v348
    %363 = vmatpush.msra.mxu0 %v347
    %364 = vmatpush.msra.mxu0 %v346
    %365 = vmatpush.msra.mxu0 %v345
    %366 = vmatmul.f32.gmra.mxu0 %v112
    %v367 = vpop.f32.mrf.mxu0
    %v368 = vadd.f32 %v349, %v367
    %369 = vmatmul.f32.gmra.mxu0 %v115
    %v370 = vpop.f32.mrf.mxu0
    %v371 = vadd.f32 %v349, %v370
    %372 = vdwg.mxu0
    %s373 = scalar_lea.vmem %s2, 288
    %v374 = vld [vmem:[%s373] sm:$0xff]
    %v375 = vld [vmem:[%s373 + $0x8] sm:$0xff]
    %v376 = vld [vmem:[%s373 + $0x10] sm:$0xff]
    %v377 = vld [vmem:[%s373 + $0x18] sm:$0xff]
    %v378 = vperm.slane %v28, 0
    %379 = vmatpush.msra.mxu0 0.0
    %380 = vmatpush.msra.mxu0 0.0
    %381 = vmatpush.msra.mxu0 0.0
    %382 = vmatpush.msra.mxu0 0.0
    %383 = vmatpush.msra.mxu0 0.0
    %384 = vmatpush.msra.mxu0 0.0
    %385 = vmatpush.msra.mxu0 0.0
    %386 = vmatpush.msra.mxu0 0.0
    %387 = vmatpush.msra.mxu0 0.0
    %388 = vmatpush.msra.mxu0 0.0
    %389 = vmatpush.msra.mxu0 0.0
    %390 = vmatpush.msra.mxu0 0.0
    %391 = vmatpush.msra.mxu0 %v377
    %392 = vmatpush.msra.mxu0 %v376
    %393 = vmatpush.msra.mxu0 %v375
    %394 = vmatpush.msra.mxu0 %v374
    %395 = vmatmul.f32.gmra.mxu0 %v112
    %v396 = vpop.f32.mrf.mxu0
    %v397 = vadd.f32 %v378, %v396
    %398 = vmatmul.f32.gmra.mxu0 %v115
    %v399 = vpop.f32.mrf.mxu0
    %v400 = vadd.f32 %v378, %v399
    %401 = vdwg.mxu0
    %v402 = vmul.f32 %v339, 0.35355338
    %v403 = vmul.f32 %v342, 0.35355338
    %v405 = vsel %vm200, %v402, 0
    %v408 = vsel %vm200, %v403, 0
    %v411 = vsel %vm200, %v368, 0
    %v414 = vsel %vm200, %v371, 0
    %416 = vmatpush.xpose.msra.mxu0 0.0
    %417 = vmatpush.xpose.msra.mxu0 0.0
    %418 = vmatpush.xpose.msra.mxu0 0.0
    %419 = vmatpush.xpose.msra.mxu0 0.0
    %420 = vmatpush.xpose.msra.mxu0 0.0
    %421 = vmatpush.xpose.msra.mxu0 0.0
    %422 = vmatpush.xpose.msra.mxu0 0.0
    %423 = vmatpush.xpose.msra.mxu0 0.0
    %424 = vmatpush.xpose.msra.mxu0 0.0
    %425 = vmatpush.xpose.msra.mxu0 0.0
    %426 = vmatpush.xpose.msra.mxu0 0.0
    %427 = vmatpush.xpose.msra.mxu0 0.0
    %428 = vmatpush.xpose.msra.mxu0 0.0
    %429 = vmatpush.xpose.msra.mxu0 0.0
    %430 = vmatpush.xpose.msra.mxu0 %v414
    %431 = vmatpush.xpose.msra.mxu0 %v411
    %432 = vmatmul.f32.gmra.mxu0 %v405
    %v433 = vpop.f32.mrf.mxu0
    %v434 = vadd.f32 %v104, %v433
    %435 = vmatmul.f32.gmra.mxu0 %v408
    %v436 = vpop.f32.mrf.mxu0
    %v437 = vadd.f32 %v105, %v436
    %438 = vdwg.mxu0
    %v439 = vsel %vm236, %v434, -inf
    %440 = vmax.xlane.f32.xlu0 %v439
    %v441 = vpop.xlane.xlu0 %440
    %v442 = vsel %vm236, %v437, -inf
    %443 = vmax.xlane.f32.xlu0 %v442
    %v444 = vpop.xlane.xlu0 %443
    %v445 = vsub.f32 %v434, %v441
    %v446 = vsub.f32 %v437, %v444
    %v447 = vmul.f32 %v445, 1.442695
    %v448 = vpow.pop %v447
    %v449 = vmul.f32 %v446, 1.442695
    %v450 = vpow.pop %v449
    %v451 = vsel %vm236, %v448, 0.0
    %452 = vadd.xlane.f32.xlu0 %v451
    %v453 = vpop.xlane.xlu0 %452
    %v454 = vsel %vm236, %v450, 0.0
    %455 = vadd.xlane.f32.xlu0 %v454
    %v456 = vpop.xlane.xlu0 %455
    %v457 = vrcp.pop %v453
    %v458 = vmul.f32 %v453, %v457
    %v459 = vsub.f32 1.0, %v458
    %v460 = vmul.f32 %v457, %v459
    %v461 = vadd.f32 %v457, %v460
    %vm462 = vweird.f32 %v453
    %vm463 = vweird.f32 %v457
    %vm464 = vmor %vm462, %vm463
    %v465 = vsel %vm464, %v457, %v461
    %v466 = vand.u32 2147483647, %v453
    %vm467 = vcmp.eq.f32.partialorder %v466, 8.507059e+37
    %v468 = vand.u32 %v453, 2147483648
    %v469 = vor.u32 1.1754944e-38, %v468
    %v470 = vsel %vm467, %v469, %v465
    %v471 = vrcp.pop %v456
    %v472 = vmul.f32 %v456, %v471
    %v473 = vsub.f32 1.0, %v472
    %v474 = vmul.f32 %v471, %v473
    %v475 = vadd.f32 %v471, %v474
    %vm476 = vweird.f32 %v456
    %vm477 = vweird.f32 %v471
    %vm478 = vmor %vm476, %vm477
    %v479 = vsel %vm478, %v471, %v475
    %v480 = vand.u32 2147483647, %v456
    %vm481 = vcmp.eq.f32.partialorder %v480, 8.507059e+37
    %v482 = vand.u32 %v456, 2147483648
    %v483 = vor.u32 1.1754944e-38, %v482
    %v484 = vsel %vm481, %v483, %v479
    %v485 = vmul.f32 %v448, %v470
    %v486 = vmul.f32 %v450, %v484
    %v488 = vsel %vm236, %v485, 0
    %v491 = vsel %vm236, %v486, 0
    %493 = vmatpush.msra.mxu0 0.0
    %494 = vmatpush.msra.mxu0 0.0
    %495 = vmatpush.msra.mxu0 0.0
    %496 = vmatpush.msra.mxu0 0.0
    %497 = vmatpush.msra.mxu0 0.0
    %498 = vmatpush.msra.mxu0 0.0
    %499 = vmatpush.msra.mxu0 0.0
    %500 = vmatpush.msra.mxu0 0.0
    %501 = vmatpush.msra.mxu0 0.0
    %502 = vmatpush.msra.mxu0 0.0
    %503 = vmatpush.msra.mxu0 0.0
    %504 = vmatpush.msra.mxu0 0.0
    %505 = vmatpush.msra.mxu0 0.0
    %506 = vmatpush.msra.mxu0 0.0
    %507 = vmatpush.msra.mxu0 %v400
    %508 = vmatpush.msra.mxu0 %v397
    %509 = vmatmul.f32.gmra.mxu0 %v488
    %v510 = vpop.f32.mrf.mxu0
    %v511 = vadd.f32 0.0, %v510
    %512 = vmatmul.f32.gmra.mxu0 %v491
    %v513 = vpop.f32.mrf.mxu0
    %v514 = vadd.f32 0.0, %v513
    %515 = vdwg.mxu0
    %s516 = scalar_lea.vmem %s3, 8
    %v517 = vld [vmem:[%s516] sm:$0xff]
    %v519 = vsel %vm200, %v511, 0
    %v522 = vsel %vm200, %v514, 0
    %524 = vmatpush.msra.mxu0 0.0
    %525 = vmatpush.msra.mxu0 0.0
    %526 = vmatpush.msra.mxu0 0.0
    %527 = vmatpush.msra.mxu0 0.0
    %528 = vmatpush.msra.mxu0 0.0
    %529 = vmatpush.msra.mxu0 0.0
    %530 = vmatpush.msra.mxu0 0.0
    %531 = vmatpush.msra.mxu0 0.0
    %532 = vmatpush.msra.mxu0 0.0
    %533 = vmatpush.msra.mxu0 0.0
    %534 = vmatpush.msra.mxu0 0.0
    %535 = vmatpush.msra.mxu0 0.0
    %536 = vmatpush.msra.mxu0 0.0
    %537 = vmatpush.msra.mxu0 0.0
    %538 = vmatpush.msra.mxu0 0.0
    %539 = vmatpush.msra.mxu0 %v517
    %540 = vmatmul.f32.gmra.mxu0 %v519
    %v541 = vpop.f32.mrf.mxu0
    %v542 = vadd.f32 0.0, %v541
    %543 = vmatmul.f32.gmra.mxu0 %v522
    %v544 = vpop.f32.mrf.mxu0
    %v545 = vadd.f32 0.0, %v544
    %546 = vdwg.mxu0
    %v548 = vsel %vm200, %v309, 0
    %v551 = vsel %vm200, %v312, 0
    %553 = vmatpush.msra.mxu0 0.0
    %554 = vmatpush.msra.mxu0 0.0
    %555 = vmatpush.msra.mxu0 0.0
    %556 = vmatpush.msra.mxu0 0.0
    %557 = vmatpush.msra.mxu0 0.0
    %558 = vmatpush.msra.mxu0 0.0
    %559 = vmatpush.msra.mxu0 0.0
    %560 = vmatpush.msra.mxu0 0.0
    %561 = vmatpush.msra.mxu0 0.0
    %562 = vmatpush.msra.mxu0 0.0
    %563 = vmatpush.msra.mxu0 0.0
    %564 = vmatpush.msra.mxu0 0.0
    %565 = vmatpush.msra.mxu0 0.0
    %566 = vmatpush.msra.mxu0 0.0
    %567 = vmatpush.msra.mxu0 0.0
    %568 = vmatpush.msra.mxu0 %v314
    %569 = vmatmul.f32.gmra.mxu0 %v548
    %v570 = vpop.f32.mrf.mxu0
    %v571 = vadd.f32 %v542, %v570
    %572 = vmatmul.f32.gmra.mxu0 %v551
    %v573 = vpop.f32.mrf.mxu0
    %v574 = vadd.f32 %v545, %v573
    %575 = vdwg.mxu0
    %s576 = scalar_lea.vmem %s2, 64
    %v577 = vld [vmem:[%s576] sm:$0xff]
    %v578 = vld [vmem:[%s576 + $0x8] sm:$0xff]
    %v579 = vld [vmem:[%s576 + $0x10] sm:$0xff]
    %v580 = vld [vmem:[%s576 + $0x18] sm:$0xff]
    %v581 = vperm.slane %v27, 1
    %582 = vmatpush.msra.mxu0 0.0
    %583 = vmatpush.msra.mxu0 0.0
    %584 = vmatpush.msra.mxu0 0.0
    %585 = vmatpush.msra.mxu0 0.0
    %586 = vmatpush.msra.mxu0 0.0
    %587 = vmatpush.msra.mxu0 0.0
    %588 = vmatpush.msra.mxu0 0.0
    %589 = vmatpush.msra.mxu0 0.0
    %590 = vmatpush.msra.mxu0 0.0
    %591 = vmatpush.msra.mxu0 0.0
    %592 = vmatpush.msra.mxu0 0.0
    %593 = vmatpush.msra.mxu0 0.0
    %594 = vmatpush.msra.mxu0 %v580
    %595 = vmatpush.msra.mxu0 %v579
    %596 = vmatpush.msra.mxu0 %v578
    %597 = vmatpush.msra.mxu0 %v577
    %598 = vmatmul.f32.gmra.mxu0 %v112
    %v599 = vpop.f32.mrf.mxu0
    %v600 = vadd.f32 %v581, %v599
    %601 = vmatmul.f32.gmra.mxu0 %v115
    %v602 = vpop.f32.mrf.mxu0
    %v603 = vadd.f32 %v581, %v602
    %604 = vdwg.mxu0
    %s605 = scalar_lea.vmem %s2, 192
    %v606 = vld [vmem:[%s605] sm:$0xff]
    %v607 = vld [vmem:[%s605 + $0x8] sm:$0xff]
    %v608 = vld [vmem:[%s605 + $0x10] sm:$0xff]
    %v609 = vld [vmem:[%s605 + $0x18] sm:$0xff]
    %v610 = vperm.slane %v27, 5
    %611 = vmatpush.msra.mxu0 0.0
    %612 = vmatpush.msra.mxu0 0.0
    %613 = vmatpush.msra.mxu0 0.0
    %614 = vmatpush.msra.mxu0 0.0
    %615 = vmatpush.msra.mxu0 0.0
    %616 = vmatpush.msra.mxu0 0.0
    %617 = vmatpush.msra.mxu0 0.0
    %618 = vmatpush.msra.mxu0 0.0
    %619 = vmatpush.msra.mxu0 0.0
    %620 = vmatpush.msra.mxu0 0.0
    %621 = vmatpush.msra.mxu0 0.0
    %622 = vmatpush.msra.mxu0 0.0
    %623 = vmatpush.msra.mxu0 %v609
    %624 = vmatpush.msra.mxu0 %v608
    %625 = vmatpush.msra.mxu0 %v607
    %626 = vmatpush.msra.mxu0 %v606
    %627 = vmatmul.f32.gmra.mxu0 %v112
    %v628 = vpop.f32.mrf.mxu0
    %v629 = vadd.f32 %v610, %v628
    %630 = vmatmul.f32.gmra.mxu0 %v115
    %v631 = vpop.f32.mrf.mxu0
    %v632 = vadd.f32 %v610, %v631
    %633 = vdwg.mxu0
    %s634 = scalar_lea.vmem %s2, 320
    %v635 = vld [vmem:[%s634] sm:$0xff]
    %v636 = vld [vmem:[%s634 + $0x8] sm:$0xff]
    %v637 = vld [vmem:[%s634 + $0x10] sm:$0xff]
    %v638 = vld [vmem:[%s634 + $0x18] sm:$0xff]
    %v639 = vperm.slane %v28, 1
    %640 = vmatpush.msra.mxu0 0.0
    %641 = vmatpush.msra.mxu0 0.0
    %642 = vmatpush.msra.mxu0 0.0
    %643 = vmatpush.msra.mxu0 0.0
    %644 = vmatpush.msra.mxu0 0.0
    %645 = vmatpush.msra.mxu0 0.0
    %646 = vmatpush.msra.mxu0 0.0
    %647 = vmatpush.msra.mxu0 0.0
    %648 = vmatpush.msra.mxu0 0.0
    %649 = vmatpush.msra.mxu0 0.0
    %650 = vmatpush.msra.mxu0 0.0
    %651 = vmatpush.msra.mxu0 0.0
    %652 = vmatpush.msra.mxu0 %v638
    %653 = vmatpush.msra.mxu0 %v637
    %654 = vmatpush.msra.mxu0 %v636
    %655 = vmatpush.msra.mxu0 %v635
    %656 = vmatmul.f32.gmra.mxu0 %v112
    %v657 = vpop.f32.mrf.mxu0
    %v658 = vadd.f32 %v639, %v657
    %659 = vmatmul.f32.gmra.mxu0 %v115
    %v660 = vpop.f32.mrf.mxu0
    %v661 = vadd.f32 %v639, %v660
    %662 = vdwg.mxu0
    %v663 = vmul.f32 %v600, 0.35355338
    %v664 = vmul.f32 %v603, 0.35355338
    %v666 = vsel %vm200, %v663, 0
    %v669 = vsel %vm200, %v664, 0
    %v672 = vsel %vm200, %v629, 0
    %v675 = vsel %vm200, %v632, 0
    %677 = vmatpush.xpose.msra.mxu0 0.0
    %678 = vmatpush.xpose.msra.mxu0 0.0
    %679 = vmatpush.xpose.msra.mxu0 0.0
    %680 = vmatpush.xpose.msra.mxu0 0.0
    %681 = vmatpush.xpose.msra.mxu0 0.0
    %682 = vmatpush.xpose.msra.mxu0 0.0
    %683 = vmatpush.xpose.msra.mxu0 0.0
    %684 = vmatpush.xpose.msra.mxu0 0.0
    %685 = vmatpush.xpose.msra.mxu0 0.0
    %686 = vmatpush.xpose.msra.mxu0 0.0
    %687 = vmatpush.xpose.msra.mxu0 0.0
    %688 = vmatpush.xpose.msra.mxu0 0.0
    %689 = vmatpush.xpose.msra.mxu0 0.0
    %690 = vmatpush.xpose.msra.mxu0 0.0
    %691 = vmatpush.xpose.msra.mxu0 %v675
    %692 = vmatpush.xpose.msra.mxu0 %v672
    %693 = vmatmul.f32.gmra.mxu0 %v666
    %v694 = vpop.f32.mrf.mxu0
    %v695 = vadd.f32 %v104, %v694
    %696 = vmatmul.f32.gmra.mxu0 %v669
    %v697 = vpop.f32.mrf.mxu0
    %v698 = vadd.f32 %v105, %v697
    %699 = vdwg.mxu0
    %v700 = vsel %vm236, %v695, -inf
    %701 = vmax.xlane.f32.xlu0 %v700
    %v702 = vpop.xlane.xlu0 %701
    %v703 = vsel %vm236, %v698, -inf
    %704 = vmax.xlane.f32.xlu0 %v703
    %v705 = vpop.xlane.xlu0 %704
    %v706 = vsub.f32 %v695, %v702
    %v707 = vsub.f32 %v698, %v705
    %v708 = vmul.f32 %v706, 1.442695
    %v709 = vpow.pop %v708
    %v710 = vmul.f32 %v707, 1.442695
    %v711 = vpow.pop %v710
    %v712 = vsel %vm236, %v709, 0.0
    %713 = vadd.xlane.f32.xlu0 %v712
    %v714 = vpop.xlane.xlu0 %713
    %v715 = vsel %vm236, %v711, 0.0
    %716 = vadd.xlane.f32.xlu0 %v715
    %v717 = vpop.xlane.xlu0 %716
    %v718 = vrcp.pop %v714
    %v719 = vmul.f32 %v714, %v718
    %v720 = vsub.f32 1.0, %v719
    %v721 = vmul.f32 %v718, %v720
    %v722 = vadd.f32 %v718, %v721
    %vm723 = vweird.f32 %v714
    %vm724 = vweird.f32 %v718
    %vm725 = vmor %vm723, %vm724
    %v726 = vsel %vm725, %v718, %v722
    %v727 = vand.u32 2147483647, %v714
    %vm728 = vcmp.eq.f32.partialorder %v727, 8.507059e+37
    %v729 = vand.u32 %v714, 2147483648
    %v730 = vor.u32 1.1754944e-38, %v729
    %v731 = vsel %vm728, %v730, %v726
    %v732 = vrcp.pop %v717
    %v733 = vmul.f32 %v717, %v732
    %v734 = vsub.f32 1.0, %v733
    %v735 = vmul.f32 %v732, %v734
    %v736 = vadd.f32 %v732, %v735
    %vm737 = vweird.f32 %v717
    %vm738 = vweird.f32 %v732
    %vm739 = vmor %vm737, %vm738
    %v740 = vsel %vm739, %v732, %v736
    %v741 = vand.u32 2147483647, %v717
    %vm742 = vcmp.eq.f32.partialorder %v741, 8.507059e+37
    %v743 = vand.u32 %v717, 2147483648
    %v744 = vor.u32 1.1754944e-38, %v743
    %v745 = vsel %vm742, %v744, %v740
    %v746 = vmul.f32 %v709, %v731
    %v747 = vmul.f32 %v711, %v745
    %v749 = vsel %vm236, %v746, 0
    %v752 = vsel %vm236, %v747, 0
    %754 = vmatpush.msra.mxu0 0.0
    %755 = vmatpush.msra.mxu0 0.0
    %756 = vmatpush.msra.mxu0 0.0
    %757 = vmatpush.msra.mxu0 0.0
    %758 = vmatpush.msra.mxu0 0.0
    %759 = vmatpush.msra.mxu0 0.0
    %760 = vmatpush.msra.mxu0 0.0
    %761 = vmatpush.msra.mxu0 0.0
    %762 = vmatpush.msra.mxu0 0.0
    %763 = vmatpush.msra.mxu0 0.0
    %764 = vmatpush.msra.mxu0 0.0
    %765 = vmatpush.msra.mxu0 0.0
    %766 = vmatpush.msra.mxu0 0.0
    %767 = vmatpush.msra.mxu0 0.0
    %768 = vmatpush.msra.mxu0 %v661
    %769 = vmatpush.msra.mxu0 %v658
    %770 = vmatmul.f32.gmra.mxu0 %v749
    %v771 = vpop.f32.mrf.mxu0
    %v772 = vadd.f32 0.0, %v771
    %773 = vmatmul.f32.gmra.mxu0 %v752
    %v774 = vpop.f32.mrf.mxu0
    %v775 = vadd.f32 0.0, %v774
    %776 = vdwg.mxu0
    %s777 = scalar_lea.vmem %s3, 16
    %v778 = vld [vmem:[%s777] sm:$0xff]
    %v780 = vsel %vm200, %v772, 0
    %v783 = vsel %vm200, %v775, 0
    %785 = vmatpush.msra.mxu0 0.0
    %786 = vmatpush.msra.mxu0 0.0
    %787 = vmatpush.msra.mxu0 0.0
    %788 = vmatpush.msra.mxu0 0.0
    %789 = vmatpush.msra.mxu0 0.0
    %790 = vmatpush.msra.mxu0 0.0
    %791 = vmatpush.msra.mxu0 0.0
    %792 = vmatpush.msra.mxu0 0.0
    %793 = vmatpush.msra.mxu0 0.0
    %794 = vmatpush.msra.mxu0 0.0
    %795 = vmatpush.msra.mxu0 0.0
    %796 = vmatpush.msra.mxu0 0.0
    %797 = vmatpush.msra.mxu0 0.0
    %798 = vmatpush.msra.mxu0 0.0
    %799 = vmatpush.msra.mxu0 0.0
    %800 = vmatpush.msra.mxu0 %v778
    %801 = vmatmul.f32.gmra.mxu0 %v780
    %v802 = vpop.f32.mrf.mxu0
    %v803 = vadd.f32 0.0, %v802
    %804 = vmatmul.f32.gmra.mxu0 %v783
    %v805 = vpop.f32.mrf.mxu0
    %v806 = vadd.f32 0.0, %v805
    %807 = vdwg.mxu0
    %v808 = vadd.f32 %v571, %v803
    %v809 = vadd.f32 %v574, %v806
    %s810 = scalar_lea.vmem %s2, 96
    %v811 = vld [vmem:[%s810] sm:$0xff]
    %v812 = vld [vmem:[%s810 + $0x8] sm:$0xff]
    %v813 = vld [vmem:[%s810 + $0x10] sm:$0xff]
    %v814 = vld [vmem:[%s810 + $0x18] sm:$0xff]
    %v815 = vperm.slane %v27, 2
    %816 = vmatpush.msra.mxu0 0.0
    %817 = vmatpush.msra.mxu0 0.0
    %818 = vmatpush.msra.mxu0 0.0
    %819 = vmatpush.msra.mxu0 0.0
    %820 = vmatpush.msra.mxu0 0.0
    %821 = vmatpush.msra.mxu0 0.0
    %822 = vmatpush.msra.mxu0 0.0
    %823 = vmatpush.msra.mxu0 0.0
    %824 = vmatpush.msra.mxu0 0.0
    %825 = vmatpush.msra.mxu0 0.0
    %826 = vmatpush.msra.mxu0 0.0
    %827 = vmatpush.msra.mxu0 0.0
    %828 = vmatpush.msra.mxu0 %v814
    %829 = vmatpush.msra.mxu0 %v813
    %830 = vmatpush.msra.mxu0 %v812
    %831 = vmatpush.msra.mxu0 %v811
    %832 = vmatmul.f32.gmra.mxu0 %v112
    %v833 = vpop.f32.mrf.mxu0
    %v834 = vadd.f32 %v815, %v833
    %835 = vmatmul.f32.gmra.mxu0 %v115
    %v836 = vpop.f32.mrf.mxu0
    %v837 = vadd.f32 %v815, %v836
    %838 = vdwg.mxu0
    %s839 = scalar_lea.vmem %s2, 224
    %v840 = vld [vmem:[%s839] sm:$0xff]
    %v841 = vld [vmem:[%s839 + $0x8] sm:$0xff]
    %v842 = vld [vmem:[%s839 + $0x10] sm:$0xff]
    %v843 = vld [vmem:[%s839 + $0x18] sm:$0xff]
    %v844 = vperm.slane %v27, 6
    %845 = vmatpush.msra.mxu0 0.0
    %846 = vmatpush.msra.mxu0 0.0
    %847 = vmatpush.msra.mxu0 0.0
    %848 = vmatpush.msra.mxu0 0.0
    %849 = vmatpush.msra.mxu0 0.0
    %850 = vmatpush.msra.mxu0 0.0
    %851 = vmatpush.msra.mxu0 0.0
    %852 = vmatpush.msra.mxu0 0.0
    %853 = vmatpush.msra.mxu0 0.0
    %854 = vmatpush.msra.mxu0 0.0
    %855 = vmatpush.msra.mxu0 0.0
    %856 = vmatpush.msra.mxu0 0.0
    %857 = vmatpush.msra.mxu0 %v843
    %858 = vmatpush.msra.mxu0 %v842
    %859 = vmatpush.msra.mxu0 %v841
    %860 = vmatpush.msra.mxu0 %v840
    %861 = vmatmul.f32.gmra.mxu0 %v112
    %v862 = vpop.f32.mrf.mxu0
    %v863 = vadd.f32 %v844, %v862
    %864 = vmatmul.f32.gmra.mxu0 %v115
    %v865 = vpop.f32.mrf.mxu0
    %v866 = vadd.f32 %v844, %v865
    %867 = vdwg.mxu0
    %s868 = scalar_lea.vmem %s2, 352
    %v869 = vld [vmem:[%s868] sm:$0xff]
    %v870 = vld [vmem:[%s868 + $0x8] sm:$0xff]
    %v871 = vld [vmem:[%s868 + $0x10] sm:$0xff]
    %v872 = vld [vmem:[%s868 + $0x18] sm:$0xff]
    %v873 = vperm.slane %v28, 2
    %874 = vmatpush.msra.mxu0 0.0
    %875 = vmatpush.msra.mxu0 0.0
    %876 = vmatpush.msra.mxu0 0.0
    %877 = vmatpush.msra.mxu0 0.0
    %878 = vmatpush.msra.mxu0 0.0
    %879 = vmatpush.msra.mxu0 0.0
    %880 = vmatpush.msra.mxu0 0.0
    %881 = vmatpush.msra.mxu0 0.0
    %882 = vmatpush.msra.mxu0 0.0
    %883 = vmatpush.msra.mxu0 0.0
    %884 = vmatpush.msra.mxu0 0.0
    %885 = vmatpush.msra.mxu0 0.0
    %886 = vmatpush.msra.mxu0 %v872
    %887 = vmatpush.msra.mxu0 %v871
    %888 = vmatpush.msra.mxu0 %v870
    %889 = vmatpush.msra.mxu0 %v869
    %890 = vmatmul.f32.gmra.mxu0 %v112
    %v891 = vpop.f32.mrf.mxu0
    %v892 = vadd.f32 %v873, %v891
    %893 = vmatmul.f32.gmra.mxu0 %v115
    %v894 = vpop.f32.mrf.mxu0
    %v895 = vadd.f32 %v873, %v894
    %896 = vdwg.mxu0
    %v897 = vmul.f32 %v834, 0.35355338
    %v898 = vmul.f32 %v837, 0.35355338
    %v900 = vsel %vm200, %v897, 0
    %v903 = vsel %vm200, %v898, 0
    %v906 = vsel %vm200, %v863, 0
    %v909 = vsel %vm200, %v866, 0
    %911 = vmatpush.xpose.msra.mxu0 0.0
    %912 = vmatpush.xpose.msra.mxu0 0.0
    %913 = vmatpush.xpose.msra.mxu0 0.0
    %914 = vmatpush.xpose.msra.mxu0 0.0
    %915 = vmatpush.xpose.msra.mxu0 0.0
    %916 = vmatpush.xpose.msra.mxu0 0.0
    %917 = vmatpush.xpose.msra.mxu0 0.0
    %918 = vmatpush.xpose.msra.mxu0 0.0
    %919 = vmatpush.xpose.msra.mxu0 0.0
    %920 = vmatpush.xpose.msra.mxu0 0.0
    %921 = vmatpush.xpose.msra.mxu0 0.0
    %922 = vmatpush.xpose.msra.mxu0 0.0
    %923 = vmatpush.xpose.msra.mxu0 0.0
    %924 = vmatpush.xpose.msra.mxu0 0.0
    %925 = vmatpush.xpose.msra.mxu0 %v909
    %926 = vmatpush.xpose.msra.mxu0 %v906
    %927 = vmatmul.f32.gmra.mxu0 %v900
    %v928 = vpop.f32.mrf.mxu0
    %v929 = vadd.f32 %v104, %v928
    %930 = vmatmul.f32.gmra.mxu0 %v903
    %v931 = vpop.f32.mrf.mxu0
    %v932 = vadd.f32 %v105, %v931
    %933 = vdwg.mxu0
    %v934 = vsel %vm236, %v929, -inf
    %935 = vmax.xlane.f32.xlu0 %v934
    %v936 = vpop.xlane.xlu0 %935
    %v937 = vsel %vm236, %v932, -inf
    %938 = vmax.xlane.f32.xlu0 %v937
    %v939 = vpop.xlane.xlu0 %938
    %v940 = vsub.f32 %v929, %v936
    %v941 = vsub.f32 %v932, %v939
    %v942 = vmul.f32 %v940, 1.442695
    %v943 = vpow.pop %v942
    %v944 = vmul.f32 %v941, 1.442695
    %v945 = vpow.pop %v944
    %v946 = vsel %vm236, %v943, 0.0
    %947 = vadd.xlane.f32.xlu0 %v946
    %v948 = vpop.xlane.xlu0 %947
    %v949 = vsel %vm236, %v945, 0.0
    %950 = vadd.xlane.f32.xlu0 %v949
    %v951 = vpop.xlane.xlu0 %950
    %v952 = vrcp.pop %v948
    %v953 = vmul.f32 %v948, %v952
    %v954 = vsub.f32 1.0, %v953
    %v955 = vmul.f32 %v952, %v954
    %v956 = vadd.f32 %v952, %v955
    %vm957 = vweird.f32 %v948
    %vm958 = vweird.f32 %v952
    %vm959 = vmor %vm957, %vm958
    %v960 = vsel %vm959, %v952, %v956
    %v961 = vand.u32 2147483647, %v948
    %vm962 = vcmp.eq.f32.partialorder %v961, 8.507059e+37
    %v963 = vand.u32 %v948, 2147483648
    %v964 = vor.u32 1.1754944e-38, %v963
    %v965 = vsel %vm962, %v964, %v960
    %v966 = vrcp.pop %v951
    %v967 = vmul.f32 %v951, %v966
    %v968 = vsub.f32 1.0, %v967
    %v969 = vmul.f32 %v966, %v968
    %v970 = vadd.f32 %v966, %v969
    %vm971 = vweird.f32 %v951
    %vm972 = vweird.f32 %v966
    %vm973 = vmor %vm971, %vm972
    %v974 = vsel %vm973, %v966, %v970
    %v975 = vand.u32 2147483647, %v951
    %vm976 = vcmp.eq.f32.partialorder %v975, 8.507059e+37
    %v977 = vand.u32 %v951, 2147483648
    %v978 = vor.u32 1.1754944e-38, %v977
    %v979 = vsel %vm976, %v978, %v974
    %v980 = vmul.f32 %v943, %v965
    %v981 = vmul.f32 %v945, %v979
    %v983 = vsel %vm236, %v980, 0
    %v986 = vsel %vm236, %v981, 0
    %988 = vmatpush.msra.mxu0 0.0
    %989 = vmatpush.msra.mxu0 0.0
    %990 = vmatpush.msra.mxu0 0.0
    %991 = vmatpush.msra.mxu0 0.0
    %992 = vmatpush.msra.mxu0 0.0
    %993 = vmatpush.msra.mxu0 0.0
    %994 = vmatpush.msra.mxu0 0.0
    %995 = vmatpush.msra.mxu0 0.0
    %996 = vmatpush.msra.mxu0 0.0
    %997 = vmatpush.msra.mxu0 0.0
    %998 = vmatpush.msra.mxu0 0.0
    %999 = vmatpush.msra.mxu0 0.0
    %1000 = vmatpush.msra.mxu0 0.0
    %1001 = vmatpush.msra.mxu0 0.0
    %1002 = vmatpush.msra.mxu0 %v895
    %1003 = vmatpush.msra.mxu0 %v892
    %1004 = vmatmul.f32.gmra.mxu0 %v983
    %v1005 = vpop.f32.mrf.mxu0
    %v1006 = vadd.f32 0.0, %v1005
    %1007 = vmatmul.f32.gmra.mxu0 %v986
    %v1008 = vpop.f32.mrf.mxu0
    %v1009 = vadd.f32 0.0, %v1008
    %1010 = vdwg.mxu0
    %s1011 = scalar_lea.vmem %s3, 24
    %v1012 = vld [vmem:[%s1011] sm:$0xff]
    %v1014 = vsel %vm200, %v1006, 0
    %v1017 = vsel %vm200, %v1009, 0
    %1019 = vmatpush.msra.mxu0 0.0
    %1020 = vmatpush.msra.mxu0 0.0
    %1021 = vmatpush.msra.mxu0 0.0
    %1022 = vmatpush.msra.mxu0 0.0
    %1023 = vmatpush.msra.mxu0 0.0
    %1024 = vmatpush.msra.mxu0 0.0
    %1025 = vmatpush.msra.mxu0 0.0
    %1026 = vmatpush.msra.mxu0 0.0
    %1027 = vmatpush.msra.mxu0 0.0
    %1028 = vmatpush.msra.mxu0 0.0
    %1029 = vmatpush.msra.mxu0 0.0
    %1030 = vmatpush.msra.mxu0 0.0
    %1031 = vmatpush.msra.mxu0 0.0
    %1032 = vmatpush.msra.mxu0 0.0
    %1033 = vmatpush.msra.mxu0 0.0
    %1034 = vmatpush.msra.mxu0 %v1012
    %1035 = vmatmul.f32.gmra.mxu0 %v1014
    %v1036 = vpop.f32.mrf.mxu0
    %v1037 = vadd.f32 0.0, %v1036
    %1038 = vmatmul.f32.gmra.mxu0 %v1017
    %v1039 = vpop.f32.mrf.mxu0
    %v1040 = vadd.f32 0.0, %v1039
    %1041 = vdwg.mxu0
    %v1042 = vadd.f32 %v808, %v1037
    %v1043 = vadd.f32 %v809, %v1040
    %v1044 = vadd.f32 %v24, %v1042
    %v1045 = vadd.f32 %v25, %v1043
    %v1046 = vperm.slane %v26, 2
    %v1047 = vadd.f32 %v1044, %v1046
    %v1048 = vadd.f32 %v1045, %v1046
    %v1049 = vsel %vm29, %v1047, 0.0
    %1050 = vadd.xlane.f32.xlu0 %v1049
    %v1051 = vpop.xlane.xlu0 %1050
    %v1052 = vsel %vm29, %v1048, 0.0
    %1053 = vadd.xlane.f32.xlu0 %v1052
    %v1054 = vpop.xlane.xlu0 %1053
    %v1055 = vmul.f32 %v1051, %v42
    %v1056 = vmul.f32 %v1054, %v42
    %v1057 = vsub.f32 %v1047, %v1055
    %v1058 = vsub.f32 %v1048, %v1056
    %v1059 = vmul.f32 %v1057, %v1057
    %v1060 = vmul.f32 %v1058, %v1058
    %v1061 = vsel %vm29, %v1059, 0.0
    %1062 = vadd.xlane.f32.xlu0 %v1061
    %v1063 = vpop.xlane.xlu0 %1062
    %v1064 = vsel %vm29, %v1060, 0.0
    %1065 = vadd.xlane.f32.xlu0 %v1064
    %v1066 = vpop.xlane.xlu0 %1065
    %v1067 = vmul.f32 %v1063, %v42
    %v1068 = vmul.f32 %v1066, %v42
    %v1069 = vadd.f32 %v1067, 1e-05
    %v1070 = vadd.f32 %v1068, 1e-05
    %v1071 = vrsqrt.pop %v1069
    %v1072 = vmul.f32 %v1071, %v1069
    %v1073 = vmul.f32 %v1072, %v1071
    %v1074 = vmul.f32 0.5, %v1073
    %v1075 = vsub.f32 1.5, %v1074
    %v1076 = vmul.f32 %v1071, %v1075
    %vm1077 = vweird.f32 %v1069
    %vm1078 = vweird.f32 %v1071
    %vm1079 = vmor %vm1077, %vm1078
    %v1080 = vsel %vm1079, %v1071, %v1076
    %v1081 = vrsqrt.pop %v1070
    %v1082 = vmul.f32 %v1081, %v1070
    %v1083 = vmul.f32 %v1082, %v1081
    %v1084 = vmul.f32 0.5, %v1083
    %v1085 = vsub.f32 1.5, %v1084
    %v1086 = vmul.f32 %v1081, %v1085
    %vm1087 = vweird.f32 %v1070
    %vm1088 = vweird.f32 %v1081
    %vm1089 = vmor %vm1087, %vm1088
    %v1090 = vsel %vm1089, %v1081, %v1086
    %v1091 = vmul.f32 %v1057, %v1080
    %v1092 = vmul.f32 %v1058, %v1090
    %v1093 = vperm.slane %v26, 3
    %v1094 = vmul.f32 %v1091, %v1093
    %v1095 = vmul.f32 %v1092, %v1093
    %v1096 = vperm.slane %v26, 4
    %v1097 = vadd.f32 %v1094, %v1096
    %v1098 = vadd.f32 %v1095, %v1096
    %v1099 = vld [vmem:[%s4] sm:$0xff]
    %v1100 = vld [vmem:[%s4 + $0x8] sm:$0xff]
    %v1101 = vld [vmem:[%s4 + $0x10] sm:$0xff]
    %v1102 = vld [vmem:[%s4 + $0x18] sm:$0xff]
    %v1103 = vperm.slane %v26, 5
    %v1105 = vsel %vm29, %v1097, 0
    %v1108 = vsel %vm29, %v1098, 0
    %1110 = vmatpush.msra.mxu0 0.0
    %1111 = vmatpush.msra.mxu0 0.0
    %1112 = vmatpush.msra.mxu0 0.0
    %1113 = vmatpush.msra.mxu0 0.0
    %1114 = vmatpush.msra.mxu0 0.0
    %1115 = vmatpush.msra.mxu0 0.0
    %1116 = vmatpush.msra.mxu0 0.0
    %1117 = vmatpush.msra.mxu0 0.0
    %1118 = vmatpush.msra.mxu0 0.0
    %1119 = vmatpush.msra.mxu0 0.0
    %1120 = vmatpush.msra.mxu0 0.0
    %1121 = vmatpush.msra.mxu0 0.0
    %1122 = vmatpush.msra.mxu0 %v1102
    %1123 = vmatpush.msra.mxu0 %v1101
    %1124 = vmatpush.msra.mxu0 %v1100
    %1125 = vmatpush.msra.mxu0 %v1099
    %1126 = vmatmul.f32.gmra.mxu0 %v1105
    %v1127 = vpop.f32.mrf.mxu0
    %v1128 = vadd.f32 %v1103, %v1127
    %1129 = vmatmul.f32.gmra.mxu0 %v1108
    %v1130 = vpop.f32.mrf.mxu0
    %v1131 = vadd.f32 %v1103, %v1130
    %1132 = vdwg.mxu0
    %v1133 = vmul.f32 %v1128, 0.5
    %v1134 = vmul.f32 %v1131, 0.5
    %v1135 = vmul.f32 %v1128, 0.044715
    %v1136 = vmul.f32 %v1131, 0.044715
    %v1137 = vmul.f32 %v1135, %v1128
    %v1138 = vmul.f32 %v1136, %v1131
    %v1139 = vmul.f32 %v1137, %v1128
    %v1140 = vmul.f32 %v1138, %v1131
    %v1141 = vadd.f32 %v1128, %v1139
    %v1142 = vadd.f32 %v1131, %v1140
    %v1143 = vmul.f32 %v1141, 0.7978846
    %v1144 = vmul.f32 %v1142, 0.7978846
    %v1145 = vtanh.pop %v1143
    %v1146 = vtanh.pop %v1144
    %v1147 = vadd.f32 %v1145, 1.0
    %v1148 = vadd.f32 %v1146, 1.0
    %v1149 = vmul.f32 %v1133, %v1147
    %v1150 = vmul.f32 %v1134, %v1148
    %v1151 = vld [vmem:[%s5] sm:$0xff]
    %v1152 = vld [vmem:[%s5 + $0x8] sm:$0xff]
    %v1153 = vld [vmem:[%s5 + $0x10] sm:$0xff]
    %v1154 = vld [vmem:[%s5 + $0x18] sm:$0xff]
    %v1155 = vld [vmem:[%s5 + $0x20] sm:$0xff]
    %v1156 = vld [vmem:[%s5 + $0x28] sm:$0xff]
    %v1157 = vld [vmem:[%s5 + $0x30] sm:$0xff]
    %v1158 = vld [vmem:[%s5 + $0x38] sm:$0xff]
    %v1159 = vld [vmem:[%s5 + $0x40] sm:$0xff]
    %v1160 = vld [vmem:[%s5 + $0x48] sm:$0xff]
    %v1161 = vld [vmem:[%s5 + $0x50] sm:$0xff]
    %v1162 = vld [vmem:[%s5 + $0x58] sm:$0xff]
    %v1163 = vld [vmem:[%s5 + $0x60] sm:$0xff]
    %v1164 = vld [vmem:[%s5 + $0x68] sm:$0xff]
    %v1165 = vld [vmem:[%s5 + $0x70] sm:$0xff]
    %v1166 = vld [vmem:[%s5 + $0x78] sm:$0xff]
    %v1167 = vperm.slane %v26, 6
    %1168 = vmatpush.msra.mxu0 %v1166
    %1169 = vmatpush.msra.mxu0 %v1165
    %1170 = vmatpush.msra.mxu0 %v1164
    %1171 = vmatpush.msra.mxu0 %v1163
    %1172 = vmatpush.msra.mxu0 %v1162
    %1173 = vmatpush.msra.mxu0 %v1161
    %1174 = vmatpush.msra.mxu0 %v1160
    %1175 = vmatpush.msra.mxu0 %v1159
    %1176 = vmatpush.msra.mxu0 %v1158
    %1177 = vmatpush.msra.mxu0 %v1157
    %1178 = vmatpush.msra.mxu0 %v1156
    %1179 = vmatpush.msra.mxu0 %v1155
    %1180 = vmatpush.msra.mxu0 %v1154
    %1181 = vmatpush.msra.mxu0 %v1153
    %1182 = vmatpush.msra.mxu0 %v1152
    %1183 = vmatpush.msra.mxu0 %v1151
    %1184 = vmatmul.f32.gmra.mxu0 %v1149
    %v1185 = vpop.f32.mrf.mxu0
    %v1186 = vadd.f32 %v1167, %v1185
    %1187 = vmatmul.f32.gmra.mxu0 %v1150
    %v1188 = vpop.f32.mrf.mxu0
    %v1189 = vadd.f32 %v1167, %v1188
    %1190 = vdwg.mxu0
    %v1191 = vadd.f32 %v1047, %v1186
    %v1192 = vadd.f32 %v1048, %v1189
    %1193 = vst.msk [vmem:[#allocation2] sm:$0xff] %vm29, %v1191
    %1194 = vst.msk [vmem:[#allocation2 + $0x8] sm:$0xff] %vm29, %v1192
    // Predicated region
    $region26: #{tpu_custom_call.1} parent=1 // pred_check
      _
    $region27: #{tpu_custom_call.1} parent=1 // pred_check_branch
      %1196 = sbr.rel (0) target = $region29
    $region28: #{tpu_custom_call.1} parent=1 // pred_region
      %1198 = vsyncadd [#allocation3], 0
      %s1199 = sshll.u32 [#allocation2], 4
      %s1200 = int_to_ptr.vmem [resolvable:$true] %s1199
      %s1201 = sshll.u32 %s6, 4
      %s1202 = int_to_ptr.hbm [resolvable:$true] %s1201
      %1207 = dma.vmem_to_hbm [thread:$0]  %s1200, 256, %s1202, [#allocation3], 128, 128, 8
    $region29: #{tpu_custom_call.1} parent=1 // pred_fallthru
      _
    // Predicated region
    $region30: #{tpu_custom_call.1} parent=1 // pred_check
      _
    $region31: #{tpu_custom_call.1} parent=1 // pred_check_branch
      %1209 = sbr.rel (0) target = $region33
    $region32: #{tpu_custom_call.1} parent=1 // pred_region
      %1211 = dma.done [#allocation3], 256
    $region33: #{tpu_custom_call.1} parent=1 // pred_fallthru
      _
    %1212 = vsyncpa [#allocation3], 1

</llo_original>
